<compile_context>
chip_gen: v5e
topology: v5e:2x2
jax: 0.10.0
libtpu: 0.0.40
codegen_flags: <defaults>
</compile_context>

<pallas_src>
import functools

import jax
import jax.numpy as jnp
import numpy as np
from jax.experimental import pallas as pl
from jax.experimental.pallas import tpu as pltpu


def _lstm_kernel(x_ref, wih_ref, whh_ref, b_ref, wlin_ref, blin_ref,
                 out_ref, gx_ref, h_ref, c_ref,
                 *, time_chunk, batch_block, hidden_size):
    Tc, Bb, H = time_chunk, batch_block, hidden_size
    t_id = pl.program_id(1)
    n_t = pl.num_programs(1)

    # ---- First time-chunk for this batch block: zero the carried state.
    @pl.when(t_id == 0)
    def _():
        h_ref[...] = jnp.zeros_like(h_ref)
        c_ref[...] = jnp.zeros_like(c_ref)

    # ---- Per-chunk non-recurrent input projection, hoisted out of the serial
    # loop:  (Tc*Bb, D) @ (D, 4H) + (b_ih + b_hh).  The (Tc, Bb, D) -> (Tc*Bb, D)
    # reshape is layout-preserving (merges leading dims onto sublanes).
    x_flat = x_ref[...].reshape(Tc * Bb, x_ref.shape[-1])
    gx_ref[...] = (
        jnp.dot(x_flat, wih_ref[...], preferred_element_type=jnp.float32)
        + b_ref[...])

    whh = whh_ref[...]                               # (H, 4H), loop-invariant

    # Lane mask (loop-invariant): lanes [2H, 3H) of the fused (Bb, 4H) gate
    # vector are the 'g' gate (tanh); i/f/o lanes use sigmoid.
    lane = jax.lax.broadcasted_iota(jnp.int32, (Bb, 4 * H), 1)
    g_mask = (lane >= 2 * H) & (lane < 3 * H)

    def step(s, carry):
        h, c = carry
        row = pl.multiple_of(s * Bb, Bb)             # sublane-aligned slice
        gates = gx_ref[pl.ds(row, Bb), :] + jnp.dot(
            h, whh, preferred_element_type=jnp.float32)        # (Bb, 4H)

        # ONE EUP pass for all four gates: tanh(x) = 2*sigmoid(2x) - 1 on the
        # 'g' lanes, plain sigmoid on i/f/o lanes.  The extra mul/selects ride
        # in idle VALU slots.
        pre = jnp.where(g_mask, gates + gates, gates)
        sig = jax.nn.sigmoid(pre)
        acts = jnp.where(g_mask, sig + sig - 1.0, sig)

        i_g = acts[:, 0 * H:1 * H]
        f_g = acts[:, 1 * H:2 * H]
        g_g = acts[:, 2 * H:3 * H]
        o_g = acts[:, 3 * H:4 * H]
        c_new = f_g * c + i_g * g_g
        # tanh(c_new) via one H-wide sigmoid (EUP) + VALU fixup.
        h_new = o_g * (2.0 * jax.nn.sigmoid(c_new + c_new) - 1.0)
        return h_new, c_new

    # h/c live in registers across the chunk (bounded unroll keeps vreg
    # pressure in check for long chunks); stored back to VMEM once per chunk.
    carry0 = (h_ref[...], c_ref[...])
    h_T, c_T = jax.lax.fori_loop(0, Tc, step, carry0, unroll=min(Tc, 8))
    h_ref[...] = h_T
    c_ref[...] = c_T

    # ---- Last time-chunk: linear head on the final hidden state.
    @pl.when(t_id == n_t - 1)
    def _():
        y = (jnp.dot(h_T, wlin_ref[...], preferred_element_type=jnp.float32)
             + blin_ref[...])
        out_ref[0] = y.astype(out_ref.dtype)


def lstm_forward(x, params, *, max_time_chunk=16):
    """x: (B, T, D) float32 (batch_first=True).  Returns (1, B, output_size)."""
    B, T, D = x.shape
    H = params["w_hh_t"].shape[0]                 # (H, 4H) -> H
    O = params["w_lin"].shape[1]                  # (H, O)  -> O

    # Pad batch to a sublane multiple; padded rows run the recurrence on
    # zero inputs (benign) and are sliced off after the call.
    B_pad = max(8, ((B + 7) // 8) * 8)
    x_tm = jnp.transpose(x, (1, 0, 2))            # time-major (T, B, D)
    if B_pad != B:
        x_tm = jnp.pad(x_tm, ((0, 0), (0, B_pad - B), (0, 0)))

    # Time chunk: largest divisor of T that is <= max_time_chunk.  Bounds the
    # per-invocation unroll and the gates scratch, and restores x prefetch
    # pipelining across chunks.
    Tc = 1
    for d in range(1, min(T, max_time_chunk) + 1):
        if T % d == 0:
            Tc = d
    n_t = T // Tc

    # Batch block: split in two (for v7x megacore) when it stays sublane-aligned.
    if B_pad >= 16 and (B_pad // 2) % 8 == 0:
        B_blk = B_pad // 2
    else:
        B_blk = B_pad
    n_b = B_pad // B_blk

    bias = (params["b_ih"] + params["b_hh"]).reshape(1, 4 * H)
    b_lin = params["b_lin"].reshape(1, O)

    kernel = functools.partial(
        _lstm_kernel, time_chunk=Tc, batch_block=B_blk, hidden_size=H)

    out = pl.pallas_call(
        kernel,
        out_shape=jax.ShapeDtypeStruct((1, B_pad, O), jnp.float32),
        grid_spec=pltpu.PrefetchScalarGridSpec(
            num_scalar_prefetch=0,
            grid=(n_b, n_t),
            in_specs=[
                pl.BlockSpec((Tc, B_blk, D), lambda b, t: (t, b, 0)),   # x chunk
                pl.BlockSpec((D, 4 * H), lambda b, t: (0, 0)),          # W_ih^T
                pl.BlockSpec((H, 4 * H), lambda b, t: (0, 0)),          # W_hh^T
                pl.BlockSpec((1, 4 * H), lambda b, t: (0, 0)),          # b_ih+b_hh
                pl.BlockSpec((H, O), lambda b, t: (0, 0)),              # linear W^T
                pl.BlockSpec((1, O), lambda b, t: (0, 0)),              # linear b
            ],
            # Same output block across the time axis (resident accumulator);
            # written only on the last time chunk.
            out_specs=pl.BlockSpec((1, B_blk, O), lambda b, t: (0, b, 0)),
            scratch_shapes=[
                pltpu.VMEM((Tc * B_blk, 4 * H), jnp.float32),   # gates_x chunk
                pltpu.VMEM((B_blk, H), jnp.float32),            # h (persistent)
                pltpu.VMEM((B_blk, H), jnp.float32),            # c (persistent)
            ],
        ),
        compiler_params=pltpu.CompilerParams(
            dimension_semantics=("parallel", "arbitrary"),
            vmem_limit_bytes=32 * 1024 * 1024,
        ),
    )(x_tm, params["w_ih_t"], params["w_hh_t"], bias,
      params["w_lin"], b_lin)
    return out[:, :B, :]


def init_params(key, input_size=8, hidden_size=32, output_size=1):
    """Deterministic init mimicking PyTorch's U(-1/sqrt(H), 1/sqrt(H))."""
    ks = jax.random.split(key, 6)
    bound = 1.0 / np.sqrt(hidden_size)
    u = lambda k, shape: jax.random.uniform(
        k, shape, jnp.float32, minval=-bound, maxval=bound)
    w_ih = u(ks[0], (4 * hidden_size, input_size))    # PyTorch layout (4H, D)
    w_hh = u(ks[1], (4 * hidden_size, hidden_size))   # (4H, H)
    b_ih = u(ks[2], (4 * hidden_size,))
    b_hh = u(ks[3], (4 * hidden_size,))
    w_lin_pt = u(ks[4], (output_size, hidden_size))   # PyTorch Linear (O, H)
    b_lin = u(ks[5], (output_size,))
    return {
        "w_ih_t": w_ih.T,                 # (D, 4H)
        "w_hh_t": w_hh.T,                 # (H, 4H)
        "b_ih": b_ih,
        "b_hh": b_hh,
        "w_lin": w_lin_pt.T,              # (H, O)
        "b_lin": b_lin,
    }


def lstm_reference(x, params):
    """Pure-JAX reference of the same forward pass (for verification)."""
    B, T, D = x.shape
    H = params["w_hh_t"].shape[0]
    bias = params["b_ih"] + params["b_hh"]

    def step(carry, x_t):
        h, c = carry
        gates = x_t @ params["w_ih_t"] + h @ params["w_hh_t"] + bias
        i = jax.nn.sigmoid(gates[:, 0 * H:1 * H])
        f = jax.nn.sigmoid(gates[:, 1 * H:2 * H])
        g = jnp.tanh(gates[:, 2 * H:3 * H])
        o = jax.nn.sigmoid(gates[:, 3 * H:4 * H])
        c = f * c + i * g
        h = o * jnp.tanh(c)
        return (h, c), None

    h0 = jnp.zeros((B, H), jnp.float32)
    c0 = jnp.zeros((B, H), jnp.float32)
    (hT, _), _ = jax.lax.scan(step, (h0, c0), jnp.transpose(x, (1, 0, 2)))
    out = hT @ params["w_lin"] + params["b_lin"]
    return out[None]                      # (1, B, O)


if __name__ == "__main__":
    key = jax.random.PRNGKey(0)
    k_x, k_p, k_x2 = jax.random.split(key, 3)

    # Spec-consistent small shapes: batch=2, seq=8, input_size=8, hidden=32, out=1.
    B, T, D, H, O = 2, 8, 8, 32, 1
    params = init_params(k_p, input_size=D, hidden_size=H, output_size=O)
    x = jax.random.normal(k_x, (B, T, D), jnp.float32)

    out = jax.block_until_ready(lstm_forward(x, params))
    assert out.shape == (1, B, O), out.shape
    ref = lstm_reference(x, params)
    np.testing.assert_allclose(np.asarray(out), np.asarray(ref),
                               rtol=1e-4, atol=1e-5)

    # Longer sequence: exercises the time-chunked grid (3 chunks of 16 steps,
    # persistent h/c scratch carried across grid iterations, pl.when finalize).
    T2 = 48
    x2 = jax.random.normal(k_x2, (B, T2, D), jnp.float32)
    out2 = jax.block_until_ready(lstm_forward(x2, params))
    ref2 = lstm_reference(x2, params)
    np.testing.assert_allclose(np.asarray(out2), np.asarray(ref2),
                               rtol=1e-3, atol=1e-4)

    print("KERNEL_OK")
</pallas_src>

<mosaic_0001>
module attributes {stable_mosaic.version = 11 : i64} {
  func.func @_lstm_kernel(%arg0: i32, %arg1: i32, %arg2: memref<8x8x8xf32, #tpu.memory_space<vmem>>, %arg3: memref<8x128xf32, #tpu.memory_space<vmem>>, %arg4: memref<32x128xf32, #tpu.memory_space<vmem>>, %arg5: memref<1x128xf32, #tpu.memory_space<vmem>>, %arg6: memref<32x1xf32, #tpu.memory_space<vmem>>, %arg7: memref<1x1xf32, #tpu.memory_space<vmem>>, %arg8: memref<1x8x1xf32, #tpu.memory_space<vmem>>, %arg9: memref<64x128xf32, #tpu.memory_space<vmem>>, %arg10: memref<8x32xf32, #tpu.memory_space<vmem>>, %arg11: memref<8x32xf32, #tpu.memory_space<vmem>>) attributes {dimension_semantics = [#tpu.dimension_semantics<parallel>, #tpu.dimension_semantics<arbitrary>], iteration_bounds = array<i64: 1, 1>, scalar_prefetch = 0 : i64, scratch_operands = 3 : i64, tpu.core_type = #tpu.core_type<tc>, window_params = [{transform_indices = @transform_0, window_bounds = array<i64: 8, 8, 8>}, {pipeline_mode = #tpu.pipeline_mode<synchronous>, transform_indices = @transform_1, window_bounds = array<i64: 8, 128>}, {pipeline_mode = #tpu.pipeline_mode<synchronous>, transform_indices = @transform_2, window_bounds = array<i64: 32, 128>}, {pipeline_mode = #tpu.pipeline_mode<synchronous>, transform_indices = @transform_3, window_bounds = array<i64: 1, 128>}, {pipeline_mode = #tpu.pipeline_mode<synchronous>, transform_indices = @transform_4, window_bounds = array<i64: 32, 1>}, {pipeline_mode = #tpu.pipeline_mode<synchronous>, transform_indices = @transform_5, window_bounds = array<i64: 1, 1>}, {transform_indices = @transform_6, window_bounds = array<i64: 1, 8, 1>}]} {
    %c0_i32 = arith.constant 0 : i32
    %0 = arith.cmpi eq, %arg1, %c0_i32 : i32
    %1 = arith.extui %0 : i1 to i32
    %c0_i32_0 = arith.constant 0 : i32
    %2 = arith.cmpi ne, %1, %c0_i32_0 : i32
    scf.if %2 {
      %cst_86 = arith.constant 0.000000e+00 : f32
      %305 = vector.broadcast %cst_86 : f32 to vector<8x32xf32>
      %c0_87 = arith.constant 0 : index
      %c0_88 = arith.constant 0 : index
      %306 = vector.load %arg10[%c0_87, %c0_88] : memref<8x32xf32, #tpu.memory_space<vmem>>, vector<8x32xf32>
      tpu.vector_store %arg10[%c0_87, %c0_88], %305 {strides = array<i32>} : memref<8x32xf32, #tpu.memory_space<vmem>>, vector<8x32xf32>,
      %cst_89 = arith.constant 0.000000e+00 : f32
      %307 = vector.broadcast %cst_89 : f32 to vector<8x32xf32>
      %c0_90 = arith.constant 0 : index
      %c0_91 = arith.constant 0 : index
      %308 = vector.load %arg11[%c0_90, %c0_91] : memref<8x32xf32, #tpu.memory_space<vmem>>, vector<8x32xf32>
      tpu.vector_store %arg11[%c0_90, %c0_91], %307 {strides = array<i32>} : memref<8x32xf32, #tpu.memory_space<vmem>>, vector<8x32xf32>,
    } else {
    }
    %c0 = arith.constant 0 : index
    %c0_1 = arith.constant 0 : index
    %c0_2 = arith.constant 0 : index
    %3 = vector.load %arg2[%c0, %c0_1, %c0_2] : memref<8x8x8xf32, #tpu.memory_space<vmem>>, vector<8x8x8xf32>
    %4 = vector.shape_cast %3 : vector<8x8x8xf32> to vector<64x8xf32>
    %c0_3 = arith.constant 0 : index
    %c0_4 = arith.constant 0 : index
    %5 = vector.load %arg3[%c0_3, %c0_4] : memref<8x128xf32, #tpu.memory_space<vmem>>, vector<8x128xf32>
    %cst = arith.constant dense<0.000000e+00> : vector<64x128xf32>
    %6 = tpu.matmul %4, %5, %cst {dimension_numbers = #tpu.dot_dimension_numbers<[1], [0], [0], [1], [0, 0, 1, 1], [], []>} : vector<64x8xf32>, vector<8x128xf32>, vector<64x128xf32> -> vector<64x128xf32>
    %c0_5 = arith.constant 0 : index
    %c0_6 = arith.constant 0 : index
    %7 = vector.load %arg5[%c0_5, %c0_6] : memref<1x128xf32, #tpu.memory_space<vmem>>, vector<1x128xf32>
    %8 = vector.broadcast %7 : vector<1x128xf32> to vector<64x128xf32>
    %9 = arith.addf %6, %8 : vector<64x128xf32>
    %c0_7 = arith.constant 0 : index
    %c0_8 = arith.constant 0 : index
    %10 = vector.load %arg9[%c0_7, %c0_8] : memref<64x128xf32, #tpu.memory_space<vmem>>, vector<64x128xf32>
    tpu.vector_store %arg9[%c0_7, %c0_8], %9 {strides = array<i32>} : memref<64x128xf32, #tpu.memory_space<vmem>>, vector<64x128xf32>,
    %c0_9 = arith.constant 0 : index
    %c0_10 = arith.constant 0 : index
    %11 = vector.load %arg4[%c0_9, %c0_10] : memref<32x128xf32, #tpu.memory_space<vmem>>, vector<32x128xf32>
    %12 = tpu.iota {dimensions = array<i32: 1>} : vector<8x128xi32>
    %c64_i32 = arith.constant 64 : i32
    %13 = vector.broadcast %c64_i32 : i32 to vector<8x128xi32>
    %14 = arith.cmpi sge, %12, %13 : vector<8x128xi32>
    %c96_i32 = arith.constant 96 : i32
    %15 = vector.broadcast %c96_i32 : i32 to vector<8x128xi32>
    %16 = arith.cmpi slt, %12, %15 : vector<8x128xi32>
    %17 = arith.andi %14, %16 : vector<8x128xi1>
    %c0_11 = arith.constant 0 : index
    %c0_12 = arith.constant 0 : index
    %18 = vector.load %arg10[%c0_11, %c0_12] : memref<8x32xf32, #tpu.memory_space<vmem>>, vector<8x32xf32>
    %c0_13 = arith.constant 0 : index
    %c0_14 = arith.constant 0 : index
    %19 = vector.load %arg11[%c0_13, %c0_14] : memref<8x32xf32, #tpu.memory_space<vmem>>, vector<8x32xf32>
    %c0_i32_15 = arith.constant 0 : i32
    %c8_i32 = arith.constant 8 : i32
    %20 = arith.muli %c0_i32_15, %c8_i32 : i32
    %21 = tpu.assume_multiple %20, 8 : i32
    %22 = arith.index_cast %21 : i32 to index
    %c0_16 = arith.constant 0 : index
    %23 = vector.load %arg9[%22, %c0_16] : memref<64x128xf32, #tpu.memory_space<vmem>>, vector<8x128xf32>
    %cst_17 = arith.constant dense<0.000000e+00> : vector<8x128xf32>
    %24 = tpu.matmul %18, %11, %cst_17 {dimension_numbers = #tpu.dot_dimension_numbers<[1], [0], [0], [1], [0, 0, 1, 1], [], []>} : vector<8x32xf32>, vector<32x128xf32>, vector<8x128xf32> -> vector<8x128xf32>
    %25 = arith.addf %23, %24 : vector<8x128xf32>
    %26 = arith.addf %25, %25 : vector<8x128xf32>
    %27 = arith.select %17, %26, %25 : vector<8x128xi1>, vector<8x128xf32>
    %28 = arith.negf %27 : vector<8x128xf32>
    %29 = math.exp %28 : vector<8x128xf32>
    %cst_18 = arith.constant 1.000000e+00 : f32
    %30 = vector.broadcast %cst_18 : f32 to vector<8x128xf32>
    %31 = arith.addf %30, %29 : vector<8x128xf32>
    %32 = arith.divf %30, %31 : vector<8x128xf32>
    %33 = arith.addf %32, %32 : vector<8x128xf32>
    %cst_19 = arith.constant 1.000000e+00 : f32
    %34 = vector.broadcast %cst_19 : f32 to vector<8x128xf32>
    %35 = arith.subf %33, %34 : vector<8x128xf32>
    %36 = arith.select %17, %35, %32 : vector<8x128xi1>, vector<8x128xf32>
    %37 = vector.extract_strided_slice %36 {offsets = [0, 0], sizes = [8, 32], strides = [1, 1]} : vector<8x128xf32> to vector<8x32xf32>
    %38 = vector.extract_strided_slice %36 {offsets = [0, 32], sizes = [8, 32], strides = [1, 1]} : vector<8x128xf32> to vector<8x32xf32>
    %39 = vector.extract_strided_slice %36 {offsets = [0, 64], sizes = [8, 32], strides = [1, 1]} : vector<8x128xf32> to vector<8x32xf32>
    %40 = vector.extract_strided_slice %36 {offsets = [0, 96], sizes = [8, 32], strides = [1, 1]} : vector<8x128xf32> to vector<8x32xf32>
    %41 = arith.mulf %38, %19 : vector<8x32xf32>
    %42 = arith.mulf %37, %39 : vector<8x32xf32>
    %43 = arith.addf %41, %42 : vector<8x32xf32>
    %44 = arith.addf %43, %43 : vector<8x32xf32>
    %45 = arith.negf %44 : vector<8x32xf32>
    %46 = math.exp %45 : vector<8x32xf32>
    %cst_20 = arith.constant 1.000000e+00 : f32
    %47 = vector.broadcast %cst_20 : f32 to vector<8x32xf32>
    %48 = arith.addf %47, %46 : vector<8x32xf32>
    %49 = arith.divf %47, %48 : vector<8x32xf32>
    %cst_21 = arith.constant 2.000000e+00 : f32
    %50 = vector.broadcast %cst_21 : f32 to vector<8x32xf32>
    %51 = arith.mulf %50, %49 : vector<8x32xf32>
    %cst_22 = arith.constant 1.000000e+00 : f32
    %52 = vector.broadcast %cst_22 : f32 to vector<8x32xf32>
    %53 = arith.subf %51, %52 : vector<8x32xf32>
    %54 = arith.mulf %40, %53 : vector<8x32xf32>
    %c1_i32 = arith.constant 1 : i32
    %c8_i32_23 = arith.constant 8 : i32
    %55 = arith.muli %c1_i32, %c8_i32_23 : i32
    %56 = tpu.assume_multiple %55, 8 : i32
    %57 = arith.index_cast %56 : i32 to index
    %c0_24 = arith.constant 0 : index
    %58 = vector.load %arg9[%57, %c0_24] : memref<64x128xf32, #tpu.memory_space<vmem>>, vector<8x128xf32>
    %cst_25 = arith.constant dense<0.000000e+00> : vector<8x128xf32>
    %59 = tpu.matmul %54, %11, %cst_25 {dimension_numbers = #tpu.dot_dimension_numbers<[1], [0], [0], [1], [0, 0, 1, 1], [], []>} : vector<8x32xf32>, vector<32x128xf32>, vector<8x128xf32> -> vector<8x128xf32>
    %60 = arith.addf %58, %59 : vector<8x128xf32>
    %61 = arith.addf %60, %60 : vector<8x128xf32>
    %62 = arith.select %17, %61, %60 : vector<8x128xi1>, vector<8x128xf32>
    %63 = arith.negf %62 : vector<8x128xf32>
    %64 = math.exp %63 : vector<8x128xf32>
    %cst_26 = arith.constant 1.000000e+00 : f32
    %65 = vector.broadcast %cst_26 : f32 to vector<8x128xf32>
    %66 = arith.addf %65, %64 : vector<8x128xf32>
    %67 = arith.divf %65, %66 : vector<8x128xf32>
    %68 = arith.addf %67, %67 : vector<8x128xf32>
    %cst_27 = arith.constant 1.000000e+00 : f32
    %69 = vector.broadcast %cst_27 : f32 to vector<8x128xf32>
    %70 = arith.subf %68, %69 : vector<8x128xf32>
    %71 = arith.select %17, %70, %67 : vector<8x128xi1>, vector<8x128xf32>
    %72 = vector.extract_strided_slice %71 {offsets = [0, 0], sizes = [8, 32], strides = [1, 1]} : vector<8x128xf32> to vector<8x32xf32>
    %73 = vector.extract_strided_slice %71 {offsets = [0, 32], sizes = [8, 32], strides = [1, 1]} : vector<8x128xf32> to vector<8x32xf32>
    %74 = vector.extract_strided_slice %71 {offsets = [0, 64], sizes = [8, 32], strides = [1, 1]} : vector<8x128xf32> to vector<8x32xf32>
    %75 = vector.extract_strided_slice %71 {offsets = [0, 96], sizes = [8, 32], strides = [1, 1]} : vector<8x128xf32> to vector<8x32xf32>
    %76 = arith.mulf %73, %43 : vector<8x32xf32>
    %77 = arith.mulf %72, %74 : vector<8x32xf32>
    %78 = arith.addf %76, %77 : vector<8x32xf32>
    %79 = arith.addf %78, %78 : vector<8x32xf32>
    %80 = arith.negf %79 : vector<8x32xf32>
    %81 = math.exp %80 : vector<8x32xf32>
    %cst_28 = arith.constant 1.000000e+00 : f32
    %82 = vector.broadcast %cst_28 : f32 to vector<8x32xf32>
    %83 = arith.addf %82, %81 : vector<8x32xf32>
    %84 = arith.divf %82, %83 : vector<8x32xf32>
    %cst_29 = arith.constant 2.000000e+00 : f32
    %85 = vector.broadcast %cst_29 : f32 to vector<8x32xf32>
    %86 = arith.mulf %85, %84 : vector<8x32xf32>
    %cst_30 = arith.constant 1.000000e+00 : f32
    %87 = vector.broadcast %cst_30 : f32 to vector<8x32xf32>
    %88 = arith.subf %86, %87 : vector<8x32xf32>
    %89 = arith.mulf %75, %88 : vector<8x32xf32>
    %c2_i32 = arith.constant 2 : i32
    %c8_i32_31 = arith.constant 8 : i32
    %90 = arith.muli %c2_i32, %c8_i32_31 : i32
    %91 = tpu.assume_multiple %90, 8 : i32
    %92 = arith.index_cast %91 : i32 to index
    %c0_32 = arith.constant 0 : index
    %93 = vector.load %arg9[%92, %c0_32] : memref<64x128xf32, #tpu.memory_space<vmem>>, vector<8x128xf32>
    %cst_33 = arith.constant dense<0.000000e+00> : vector<8x128xf32>
    %94 = tpu.matmul %89, %11, %cst_33 {dimension_numbers = #tpu.dot_dimension_numbers<[1], [0], [0], [1], [0, 0, 1, 1], [], []>} : vector<8x32xf32>, vector<32x128xf32>, vector<8x128xf32> -> vector<8x128xf32>
    %95 = arith.addf %93, %94 : vector<8x128xf32>
    %96 = arith.addf %95, %95 : vector<8x128xf32>
    %97 = arith.select %17, %96, %95 : vector<8x128xi1>, vector<8x128xf32>
    %98 = arith.negf %97 : vector<8x128xf32>
    %99 = math.exp %98 : vector<8x128xf32>
    %cst_34 = arith.constant 1.000000e+00 : f32
    %100 = vector.broadcast %cst_34 : f32 to vector<8x128xf32>
    %101 = arith.addf %100, %99 : vector<8x128xf32>
    %102 = arith.divf %100, %101 : vector<8x128xf32>
    %103 = arith.addf %102, %102 : vector<8x128xf32>
    %cst_35 = arith.constant 1.000000e+00 : f32
    %104 = vector.broadcast %cst_35 : f32 to vector<8x128xf32>
    %105 = arith.subf %103, %104 : vector<8x128xf32>
    %106 = arith.select %17, %105, %102 : vector<8x128xi1>, vector<8x128xf32>
    %107 = vector.extract_strided_slice %106 {offsets = [0, 0], sizes = [8, 32], strides = [1, 1]} : vector<8x128xf32> to vector<8x32xf32>
    %108 = vector.extract_strided_slice %106 {offsets = [0, 32], sizes = [8, 32], strides = [1, 1]} : vector<8x128xf32> to vector<8x32xf32>
    %109 = vector.extract_strided_slice %106 {offsets = [0, 64], sizes = [8, 32], strides = [1, 1]} : vector<8x128xf32> to vector<8x32xf32>
    %110 = vector.extract_strided_slice %106 {offsets = [0, 96], sizes = [8, 32], strides = [1, 1]} : vector<8x128xf32> to vector<8x32xf32>
    %111 = arith.mulf %108, %78 : vector<8x32xf32>
    %112 = arith.mulf %107, %109 : vector<8x32xf32>
    %113 = arith.addf %111, %112 : vector<8x32xf32>
    %114 = arith.addf %113, %113 : vector<8x32xf32>
    %115 = arith.negf %114 : vector<8x32xf32>
    %116 = math.exp %115 : vector<8x32xf32>
    %cst_36 = arith.constant 1.000000e+00 : f32
    %117 = vector.broadcast %cst_36 : f32 to vector<8x32xf32>
    %118 = arith.addf %117, %116 : vector<8x32xf32>
    %119 = arith.divf %117, %118 : vector<8x32xf32>
    %cst_37 = arith.constant 2.000000e+00 : f32
    %120 = vector.broadcast %cst_37 : f32 to vector<8x32xf32>
    %121 = arith.mulf %120, %119 : vector<8x32xf32>
    %cst_38 = arith.constant 1.000000e+00 : f32
    %122 = vector.broadcast %cst_38 : f32 to vector<8x32xf32>
    %123 = arith.subf %121, %122 : vector<8x32xf32>
    %124 = arith.mulf %110, %123 : vector<8x32xf32>
    %c3_i32 = arith.constant 3 : i32
    %c8_i32_39 = arith.constant 8 : i32
    %125 = arith.muli %c3_i32, %c8_i32_39 : i32
    %126 = tpu.assume_multiple %125, 8 : i32
    %127 = arith.index_cast %126 : i32 to index
    %c0_40 = arith.constant 0 : index
    %128 = vector.load %arg9[%127, %c0_40] : memref<64x128xf32, #tpu.memory_space<vmem>>, vector<8x128xf32>
    %cst_41 = arith.constant dense<0.000000e+00> : vector<8x128xf32>
    %129 = tpu.matmul %124, %11, %cst_41 {dimension_numbers = #tpu.dot_dimension_numbers<[1], [0], [0], [1], [0, 0, 1, 1], [], []>} : vector<8x32xf32>, vector<32x128xf32>, vector<8x128xf32> -> vector<8x128xf32>
    %130 = arith.addf %128, %129 : vector<8x128xf32>
    %131 = arith.addf %130, %130 : vector<8x128xf32>
    %132 = arith.select %17, %131, %130 : vector<8x128xi1>, vector<8x128xf32>
    %133 = arith.negf %132 : vector<8x128xf32>
    %134 = math.exp %133 : vector<8x128xf32>
    %cst_42 = arith.constant 1.000000e+00 : f32
    %135 = vector.broadcast %cst_42 : f32 to vector<8x128xf32>
    %136 = arith.addf %135, %134 : vector<8x128xf32>
    %137 = arith.divf %135, %136 : vector<8x128xf32>
    %138 = arith.addf %137, %137 : vector<8x128xf32>
    %cst_43 = arith.constant 1.000000e+00 : f32
    %139 = vector.broadcast %cst_43 : f32 to vector<8x128xf32>
    %140 = arith.subf %138, %139 : vector<8x128xf32>
    %141 = arith.select %17, %140, %137 : vector<8x128xi1>, vector<8x128xf32>
    %142 = vector.extract_strided_slice %141 {offsets = [0, 0], sizes = [8, 32], strides = [1, 1]} : vector<8x128xf32> to vector<8x32xf32>
    %143 = vector.extract_strided_slice %141 {offsets = [0, 32], sizes = [8, 32], strides = [1, 1]} : vector<8x128xf32> to vector<8x32xf32>
    %144 = vector.extract_strided_slice %141 {offsets = [0, 64], sizes = [8, 32], strides = [1, 1]} : vector<8x128xf32> to vector<8x32xf32>
    %145 = vector.extract_strided_slice %141 {offsets = [0, 96], sizes = [8, 32], strides = [1, 1]} : vector<8x128xf32> to vector<8x32xf32>
    %146 = arith.mulf %143, %113 : vector<8x32xf32>
    %147 = arith.mulf %142, %144 : vector<8x32xf32>
    %148 = arith.addf %146, %147 : vector<8x32xf32>
    %149 = arith.addf %148, %148 : vector<8x32xf32>
    %150 = arith.negf %149 : vector<8x32xf32>
    %151 = math.exp %150 : vector<8x32xf32>
    %cst_44 = arith.constant 1.000000e+00 : f32
    %152 = vector.broadcast %cst_44 : f32 to vector<8x32xf32>
    %153 = arith.addf %152, %151 : vector<8x32xf32>
    %154 = arith.divf %152, %153 : vector<8x32xf32>
    %cst_45 = arith.constant 2.000000e+00 : f32
    %155 = vector.broadcast %cst_45 : f32 to vector<8x32xf32>
    %156 = arith.mulf %155, %154 : vector<8x32xf32>
    %cst_46 = arith.constant 1.000000e+00 : f32
    %157 = vector.broadcast %cst_46 : f32 to vector<8x32xf32>
    %158 = arith.subf %156, %157 : vector<8x32xf32>
    %159 = arith.mulf %145, %158 : vector<8x32xf32>
    %c4_i32 = arith.constant 4 : i32
    %c8_i32_47 = arith.constant 8 : i32
    %160 = arith.muli %c4_i32, %c8_i32_47 : i32
    %161 = tpu.assume_multiple %160, 8 : i32
    %162 = arith.index_cast %161 : i32 to index
    %c0_48 = arith.constant 0 : index
    %163 = vector.load %arg9[%162, %c0_48] : memref<64x128xf32, #tpu.memory_space<vmem>>, vector<8x128xf32>
    %cst_49 = arith.constant dense<0.000000e+00> : vector<8x128xf32>
    %164 = tpu.matmul %159, %11, %cst_49 {dimension_numbers = #tpu.dot_dimension_numbers<[1], [0], [0], [1], [0, 0, 1, 1], [], []>} : vector<8x32xf32>, vector<32x128xf32>, vector<8x128xf32> -> vector<8x128xf32>
    %165 = arith.addf %163, %164 : vector<8x128xf32>
    %166 = arith.addf %165, %165 : vector<8x128xf32>
    %167 = arith.select %17, %166, %165 : vector<8x128xi1>, vector<8x128xf32>
    %168 = arith.negf %167 : vector<8x128xf32>
    %169 = math.exp %168 : vector<8x128xf32>
    %cst_50 = arith.constant 1.000000e+00 : f32
    %170 = vector.broadcast %cst_50 : f32 to vector<8x128xf32>
    %171 = arith.addf %170, %169 : vector<8x128xf32>
    %172 = arith.divf %170, %171 : vector<8x128xf32>
    %173 = arith.addf %172, %172 : vector<8x128xf32>
    %cst_51 = arith.constant 1.000000e+00 : f32
    %174 = vector.broadcast %cst_51 : f32 to vector<8x128xf32>
    %175 = arith.subf %173, %174 : vector<8x128xf32>
    %176 = arith.select %17, %175, %172 : vector<8x128xi1>, vector<8x128xf32>
    %177 = vector.extract_strided_slice %176 {offsets = [0, 0], sizes = [8, 32], strides = [1, 1]} : vector<8x128xf32> to vector<8x32xf32>
    %178 = vector.extract_strided_slice %176 {offsets = [0, 32], sizes = [8, 32], strides = [1, 1]} : vector<8x128xf32> to vector<8x32xf32>
    %179 = vector.extract_strided_slice %176 {offsets = [0, 64], sizes = [8, 32], strides = [1, 1]} : vector<8x128xf32> to vector<8x32xf32>
    %180 = vector.extract_strided_slice %176 {offsets = [0, 96], sizes = [8, 32], strides = [1, 1]} : vector<8x128xf32> to vector<8x32xf32>
    %181 = arith.mulf %178, %148 : vector<8x32xf32>
    %182 = arith.mulf %177, %179 : vector<8x32xf32>
    %183 = arith.addf %181, %182 : vector<8x32xf32>
    %184 = arith.addf %183, %183 : vector<8x32xf32>
    %185 = arith.negf %184 : vector<8x32xf32>
    %186 = math.exp %185 : vector<8x32xf32>
    %cst_52 = arith.constant 1.000000e+00 : f32
    %187 = vector.broadcast %cst_52 : f32 to vector<8x32xf32>
    %188 = arith.addf %187, %186 : vector<8x32xf32>
    %189 = arith.divf %187, %188 : vector<8x32xf32>
    %cst_53 = arith.constant 2.000000e+00 : f32
    %190 = vector.broadcast %cst_53 : f32 to vector<8x32xf32>
    %191 = arith.mulf %190, %189 : vector<8x32xf32>
    %cst_54 = arith.constant 1.000000e+00 : f32
    %192 = vector.broadcast %cst_54 : f32 to vector<8x32xf32>
    %193 = arith.subf %191, %192 : vector<8x32xf32>
    %194 = arith.mulf %180, %193 : vector<8x32xf32>
    %c5_i32 = arith.constant 5 : i32
    %c8_i32_55 = arith.constant 8 : i32
    %195 = arith.muli %c5_i32, %c8_i32_55 : i32
    %196 = tpu.assume_multiple %195, 8 : i32
    %197 = arith.index_cast %196 : i32 to index
    %c0_56 = arith.constant 0 : index
    %198 = vector.load %arg9[%197, %c0_56] : memref<64x128xf32, #tpu.memory_space<vmem>>, vector<8x128xf32>
    %cst_57 = arith.constant dense<0.000000e+00> : vector<8x128xf32>
    %199 = tpu.matmul %194, %11, %cst_57 {dimension_numbers = #tpu.dot_dimension_numbers<[1], [0], [0], [1], [0, 0, 1, 1], [], []>} : vector<8x32xf32>, vector<32x128xf32>, vector<8x128xf32> -> vector<8x128xf32>
    %200 = arith.addf %198, %199 : vector<8x128xf32>
    %201 = arith.addf %200, %200 : vector<8x128xf32>
    %202 = arith.select %17, %201, %200 : vector<8x128xi1>, vector<8x128xf32>
    %203 = arith.negf %202 : vector<8x128xf32>
    %204 = math.exp %203 : vector<8x128xf32>
    %cst_58 = arith.constant 1.000000e+00 : f32
    %205 = vector.broadcast %cst_58 : f32 to vector<8x128xf32>
    %206 = arith.addf %205, %204 : vector<8x128xf32>
    %207 = arith.divf %205, %206 : vector<8x128xf32>
    %208 = arith.addf %207, %207 : vector<8x128xf32>
    %cst_59 = arith.constant 1.000000e+00 : f32
    %209 = vector.broadcast %cst_59 : f32 to vector<8x128xf32>
    %210 = arith.subf %208, %209 : vector<8x128xf32>
    %211 = arith.select %17, %210, %207 : vector<8x128xi1>, vector<8x128xf32>
    %212 = vector.extract_strided_slice %211 {offsets = [0, 0], sizes = [8, 32], strides = [1, 1]} : vector<8x128xf32> to vector<8x32xf32>
    %213 = vector.extract_strided_slice %211 {offsets = [0, 32], sizes = [8, 32], strides = [1, 1]} : vector<8x128xf32> to vector<8x32xf32>
    %214 = vector.extract_strided_slice %211 {offsets = [0, 64], sizes = [8, 32], strides = [1, 1]} : vector<8x128xf32> to vector<8x32xf32>
    %215 = vector.extract_strided_slice %211 {offsets = [0, 96], sizes = [8, 32], strides = [1, 1]} : vector<8x128xf32> to vector<8x32xf32>
    %216 = arith.mulf %213, %183 : vector<8x32xf32>
    %217 = arith.mulf %212, %214 : vector<8x32xf32>
    %218 = arith.addf %216, %217 : vector<8x32xf32>
    %219 = arith.addf %218, %218 : vector<8x32xf32>
    %220 = arith.negf %219 : vector<8x32xf32>
    %221 = math.exp %220 : vector<8x32xf32>
    %cst_60 = arith.constant 1.000000e+00 : f32
    %222 = vector.broadcast %cst_60 : f32 to vector<8x32xf32>
    %223 = arith.addf %222, %221 : vector<8x32xf32>
    %224 = arith.divf %222, %223 : vector<8x32xf32>
    %cst_61 = arith.constant 2.000000e+00 : f32
    %225 = vector.broadcast %cst_61 : f32 to vector<8x32xf32>
    %226 = arith.mulf %225, %224 : vector<8x32xf32>
    %cst_62 = arith.constant 1.000000e+00 : f32
    %227 = vector.broadcast %cst_62 : f32 to vector<8x32xf32>
    %228 = arith.subf %226, %227 : vector<8x32xf32>
    %229 = arith.mulf %215, %228 : vector<8x32xf32>
    %c6_i32 = arith.constant 6 : i32
    %c8_i32_63 = arith.constant 8 : i32
    %230 = arith.muli %c6_i32, %c8_i32_63 : i32
    %231 = tpu.assume_multiple %230, 8 : i32
    %232 = arith.index_cast %231 : i32 to index
    %c0_64 = arith.constant 0 : index
    %233 = vector.load %arg9[%232, %c0_64] : memref<64x128xf32, #tpu.memory_space<vmem>>, vector<8x128xf32>
    %cst_65 = arith.constant dense<0.000000e+00> : vector<8x128xf32>
    %234 = tpu.matmul %229, %11, %cst_65 {dimension_numbers = #tpu.dot_dimension_numbers<[1], [0], [0], [1], [0, 0, 1, 1], [], []>} : vector<8x32xf32>, vector<32x128xf32>, vector<8x128xf32> -> vector<8x128xf32>
    %235 = arith.addf %233, %234 : vector<8x128xf32>
    %236 = arith.addf %235, %235 : vector<8x128xf32>
    %237 = arith.select %17, %236, %235 : vector<8x128xi1>, vector<8x128xf32>
    %238 = arith.negf %237 : vector<8x128xf32>
    %239 = math.exp %238 : vector<8x128xf32>
    %cst_66 = arith.constant 1.000000e+00 : f32
    %240 = vector.broadcast %cst_66 : f32 to vector<8x128xf32>
    %241 = arith.addf %240, %239 : vector<8x128xf32>
    %242 = arith.divf %240, %241 : vector<8x128xf32>
    %243 = arith.addf %242, %242 : vector<8x128xf32>
    %cst_67 = arith.constant 1.000000e+00 : f32
    %244 = vector.broadcast %cst_67 : f32 to vector<8x128xf32>
    %245 = arith.subf %243, %244 : vector<8x128xf32>
    %246 = arith.select %17, %245, %242 : vector<8x128xi1>, vector<8x128xf32>
    %247 = vector.extract_strided_slice %246 {offsets = [0, 0], sizes = [8, 32], strides = [1, 1]} : vector<8x128xf32> to vector<8x32xf32>
    %248 = vector.extract_strided_slice %246 {offsets = [0, 32], sizes = [8, 32], strides = [1, 1]} : vector<8x128xf32> to vector<8x32xf32>
    %249 = vector.extract_strided_slice %246 {offsets = [0, 64], sizes = [8, 32], strides = [1, 1]} : vector<8x128xf32> to vector<8x32xf32>
    %250 = vector.extract_strided_slice %246 {offsets = [0, 96], sizes = [8, 32], strides = [1, 1]} : vector<8x128xf32> to vector<8x32xf32>
    %251 = arith.mulf %248, %218 : vector<8x32xf32>
    %252 = arith.mulf %247, %249 : vector<8x32xf32>
    %253 = arith.addf %251, %252 : vector<8x32xf32>
    %254 = arith.addf %253, %253 : vector<8x32xf32>
    %255 = arith.negf %254 : vector<8x32xf32>
    %256 = math.exp %255 : vector<8x32xf32>
    %cst_68 = arith.constant 1.000000e+00 : f32
    %257 = vector.broadcast %cst_68 : f32 to vector<8x32xf32>
    %258 = arith.addf %257, %256 : vector<8x32xf32>
    %259 = arith.divf %257, %258 : vector<8x32xf32>
    %cst_69 = arith.constant 2.000000e+00 : f32
    %260 = vector.broadcast %cst_69 : f32 to vector<8x32xf32>
    %261 = arith.mulf %260, %259 : vector<8x32xf32>
    %cst_70 = arith.constant 1.000000e+00 : f32
    %262 = vector.broadcast %cst_70 : f32 to vector<8x32xf32>
    %263 = arith.subf %261, %262 : vector<8x32xf32>
    %264 = arith.mulf %250, %263 : vector<8x32xf32>
    %c7_i32 = arith.constant 7 : i32
    %c8_i32_71 = arith.constant 8 : i32
    %265 = arith.muli %c7_i32, %c8_i32_71 : i32
    %266 = tpu.assume_multiple %265, 8 : i32
    %267 = arith.index_cast %266 : i32 to index
    %c0_72 = arith.constant 0 : index
    %268 = vector.load %arg9[%267, %c0_72] : memref<64x128xf32, #tpu.memory_space<vmem>>, vector<8x128xf32>
    %cst_73 = arith.constant dense<0.000000e+00> : vector<8x128xf32>
    %269 = tpu.matmul %264, %11, %cst_73 {dimension_numbers = #tpu.dot_dimension_numbers<[1], [0], [0], [1], [0, 0, 1, 1], [], []>} : vector<8x32xf32>, vector<32x128xf32>, vector<8x128xf32> -> vector<8x128xf32>
    %270 = arith.addf %268, %269 : vector<8x128xf32>
    %271 = arith.addf %270, %270 : vector<8x128xf32>
    %272 = arith.select %17, %271, %270 : vector<8x128xi1>, vector<8x128xf32>
    %273 = arith.negf %272 : vector<8x128xf32>
    %274 = math.exp %273 : vector<8x128xf32>
    %cst_74 = arith.constant 1.000000e+00 : f32
    %275 = vector.broadcast %cst_74 : f32 to vector<8x128xf32>
    %276 = arith.addf %275, %274 : vector<8x128xf32>
    %277 = arith.divf %275, %276 : vector<8x128xf32>
    %278 = arith.addf %277, %277 : vector<8x128xf32>
    %cst_75 = arith.constant 1.000000e+00 : f32
    %279 = vector.broadcast %cst_75 : f32 to vector<8x128xf32>
    %280 = arith.subf %278, %279 : vector<8x128xf32>
    %281 = arith.select %17, %280, %277 : vector<8x128xi1>, vector<8x128xf32>
    %282 = vector.extract_strided_slice %281 {offsets = [0, 0], sizes = [8, 32], strides = [1, 1]} : vector<8x128xf32> to vector<8x32xf32>
    %283 = vector.extract_strided_slice %281 {offsets = [0, 32], sizes = [8, 32], strides = [1, 1]} : vector<8x128xf32> to vector<8x32xf32>
    %284 = vector.extract_strided_slice %281 {offsets = [0, 64], sizes = [8, 32], strides = [1, 1]} : vector<8x128xf32> to vector<8x32xf32>
    %285 = vector.extract_strided_slice %281 {offsets = [0, 96], sizes = [8, 32], strides = [1, 1]} : vector<8x128xf32> to vector<8x32xf32>
    %286 = arith.mulf %283, %253 : vector<8x32xf32>
    %287 = arith.mulf %282, %284 : vector<8x32xf32>
    %288 = arith.addf %286, %287 : vector<8x32xf32>
    %289 = arith.addf %288, %288 : vector<8x32xf32>
    %290 = arith.negf %289 : vector<8x32xf32>
    %291 = math.exp %290 : vector<8x32xf32>
    %cst_76 = arith.constant 1.000000e+00 : f32
    %292 = vector.broadcast %cst_76 : f32 to vector<8x32xf32>
    %293 = arith.addf %292, %291 : vector<8x32xf32>
    %294 = arith.divf %292, %293 : vector<8x32xf32>
    %cst_77 = arith.constant 2.000000e+00 : f32
    %295 = vector.broadcast %cst_77 : f32 to vector<8x32xf32>
    %296 = arith.mulf %295, %294 : vector<8x32xf32>
    %cst_78 = arith.constant 1.000000e+00 : f32
    %297 = vector.broadcast %cst_78 : f32 to vector<8x32xf32>
    %298 = arith.subf %296, %297 : vector<8x32xf32>
    %299 = arith.mulf %285, %298 : vector<8x32xf32>
    %c8_i32_79 = arith.constant 8 : i32
    %c0_80 = arith.constant 0 : index
    %c0_81 = arith.constant 0 : index
    %300 = vector.load %arg10[%c0_80, %c0_81] : memref<8x32xf32, #tpu.memory_space<vmem>>, vector<8x32xf32>
    tpu.vector_store %arg10[%c0_80, %c0_81], %299 {strides = array<i32>} : memref<8x32xf32, #tpu.memory_space<vmem>>, vector<8x32xf32>,
    %c0_82 = arith.constant 0 : index
    %c0_83 = arith.constant 0 : index
    %301 = vector.load %arg11[%c0_82, %c0_83] : memref<8x32xf32, #tpu.memory_space<vmem>>, vector<8x32xf32>
    tpu.vector_store %arg11[%c0_82, %c0_83], %288 {strides = array<i32>} : memref<8x32xf32, #tpu.memory_space<vmem>>, vector<8x32xf32>,
    %c0_i32_84 = arith.constant 0 : i32
    %302 = arith.cmpi eq, %arg1, %c0_i32_84 : i32
    %303 = arith.extui %302 : i1 to i32
    %c0_i32_85 = arith.constant 0 : i32
    %304 = arith.cmpi ne, %303, %c0_i32_85 : i32
    scf.if %304 {
      %c0_86 = arith.constant 0 : index
      %c0_87 = arith.constant 0 : index
      %305 = vector.load %arg6[%c0_86, %c0_87] : memref<32x1xf32, #tpu.memory_space<vmem>>, vector<32x1xf32>
      %cst_88 = arith.constant dense<0.000000e+00> : vector<8x1xf32>
      %306 = tpu.matmul %299, %305, %cst_88 {dimension_numbers = #tpu.dot_dimension_numbers<[1], [0], [0], [1], [0, 0, 1, 1], [], []>} : vector<8x32xf32>, vector<32x1xf32>, vector<8x1xf32> -> vector<8x1xf32>
      %c0_89 = arith.constant 0 : index
      %c0_90 = arith.constant 0 : index
      %307 = vector.load %arg7[%c0_89, %c0_90] : memref<1x1xf32, #tpu.memory_space<vmem>>, vector<1x1xf32>
      %308 = vector.broadcast %307 : vector<1x1xf32> to vector<8x1xf32>
      %309 = arith.addf %306, %308 : vector<8x1xf32>
      %c0_91 = arith.constant 0 : index
      %c0_92 = arith.constant 0 : index
      %c0_93 = arith.constant 0 : index
      %310 = vector.load %arg8[%c0_91, %c0_92, %c0_93] : memref<1x8x1xf32, #tpu.memory_space<vmem>>, vector<1x8x1xf32>
      %311 = vector.shape_cast %310 : vector<1x8x1xf32> to vector<8x1xf32>
      %312 = vector.shape_cast %309 : vector<8x1xf32> to vector<1x8x1xf32>
      tpu.vector_store %arg8[%c0_91, %c0_92, %c0_93], %312 {strides = array<i32>} : memref<1x8x1xf32, #tpu.memory_space<vmem>>, vector<1x8x1xf32>,
    } else {
    }
    return
  }
  func.func @transform_0(%arg0: i32, %arg1: i32) -> (i32, i32, i32) {
    %c0_i32 = arith.constant 0 : i32
    %c0_i32_0 = arith.constant 0 : i32
    return %arg1, %arg0, %c0_i32 : i32, i32, i32
  }
  func.func @transform_1(%arg0: i32, %arg1: i32) -> (i32, i32) {
    %c0_i32 = arith.constant 0 : i32
    %c0_i32_0 = arith.constant 0 : i32
    %c0_i32_1 = arith.constant 0 : i32
    return %c0_i32, %c0_i32_0 : i32, i32
  }
  func.func @transform_2(%arg0: i32, %arg1: i32) -> (i32, i32) {
    %c0_i32 = arith.constant 0 : i32
    %c0_i32_0 = arith.constant 0 : i32
    %c0_i32_1 = arith.constant 0 : i32
    return %c0_i32, %c0_i32_0 : i32, i32
  }
  func.func @transform_3(%arg0: i32, %arg1: i32) -> (i32, i32) {
    %c0_i32 = arith.constant 0 : i32
    %c0_i32_0 = arith.constant 0 : i32
    %c0_i32_1 = arith.constant 0 : i32
    return %c0_i32, %c0_i32_0 : i32, i32
  }
  func.func @transform_4(%arg0: i32, %arg1: i32) -> (i32, i32) {
    %c0_i32 = arith.constant 0 : i32
    %c0_i32_0 = arith.constant 0 : i32
    %c0_i32_1 = arith.constant 0 : i32
    return %c0_i32, %c0_i32_0 : i32, i32
  }
  func.func @transform_5(%arg0: i32, %arg1: i32) -> (i32, i32) {
    %c0_i32 = arith.constant 0 : i32
    %c0_i32_0 = arith.constant 0 : i32
    %c0_i32_1 = arith.constant 0 : i32
    return %c0_i32, %c0_i32_0 : i32, i32
  }
  func.func @transform_6(%arg0: i32, %arg1: i32) -> (i32, i32, i32) {
    %c0_i32 = arith.constant 0 : i32
    %c0_i32_0 = arith.constant 0 : i32
    %c0_i32_1 = arith.constant 0 : i32
    return %c0_i32, %arg0, %c0_i32_0 : i32, i32, i32
  }
}

</mosaic_0001>

<llo_original>
// kernel: tpu_custom_call.1
$region0: #{tpu_custom_call.1}
  #allocation0 [shape = 'u32[]', space=smem, size = 0x4, offset = 0x4, fixed_abs, tag = 'smem constant byte address 0x4 - core index']
  #allocation1 [shape = 'u32[72,128]{1,0:T(1,128)}', space=vmem, size = 0x9000, scoped, tag = 'internal scratch']
  #allocation2 [shape = 'f32[64,128]{1,0:T(8,128)}', space=vmem, size = 0x8000, scoped, tag = 'scratch operand']
  #allocation3 [shape = 'f32[8,32]{1,0:T(8,128)}', space=vmem, size = 0x1000, scoped, tag = 'scratch operand']
  #allocation4 [shape = 'f32[8,32]{1,0:T(8,128)}', space=vmem, size = 0x1000, scoped, tag = 'scratch operand']
  #allocation5 [shape = 'f32[1,1]{1,0:T(1,128)S(1)}', space=vmem, size = 0x200, scoped, tag = 'scoped memory for tpu_custom_call.1']
  %s0 = inlined_call_operand.hbm [shape: f32[8,8,8], index: 0, kind: input, shape index: {}]
  %s1 = inlined_call_operand.hbm [shape: f32[8,128], index: 1, kind: input, shape index: {}]
  %s2 = inlined_call_operand.vmem [shape: f32[32,128], index: 2, kind: input, shape index: {}]
  %s3 = inlined_call_operand.vmem [shape: f32[1,128], index: 3, kind: input, shape index: {}]
  %s4 = inlined_call_operand.vmem [shape: f32[32,1], index: 4, kind: input, shape index: {}]
  %s5 = inlined_call_operand.<no memory space> [shape: f32[1,1], index: 5, kind: input, shape index: {}]
  %s6 = inlined_call_operand.vmem [shape: f32[1,8,1], index: 6, kind: output, shape index: {}]
  %s7 = sld [smem:[#allocation0]]
  $region50: #{tpu_custom_call.1} parent=0
    _
  %s9 = ssub.s32 1, %s7
  %s10 = scalar_select 0, %s9, %s7
  %v11 = vstv %s5
  %12 = vst [vmem:[#allocation5] sm:$0x1] %v11
  $region1: #{tpu_custom_call.1} parent=0
    #allocation6 [shape = 'u8[32768]{0}', space=vmem, size = 0x8000, scoped, tag = 'input window, operand 0, single buffered']
    #allocation7 [shape = 's32[1]{0}', space=sflag, size = 0x4, scoped, tag = 'scoped memory for tpu_custom_call.1']
    #allocation8 [shape = 'u8[4096]{0}', space=vmem, size = 0x1000, scoped, tag = 'input window, operand 1, single buffered']
    #allocation9 [shape = 's32[1]{0}', space=sflag, size = 0x4, scoped, tag = 'scoped memory for tpu_custom_call.1']
    %13 = vsyncpa [#allocation7], 0
    %14 = vsyncpa [#allocation9], 0
    // Predicated region
    $region2: #{tpu_custom_call.1} parent=1 // pred_check
      _
    $region3: #{tpu_custom_call.1} parent=1 // pred_check_branch
      %16 = sbr.rel (0) target = $region5
    $region4: #{tpu_custom_call.1} parent=1 // pred_region
      %18 = vsyncadd [#allocation7], 0
      %s19 = sshll.u32 %s0, 4
      %s20 = int_to_ptr.hbm [resolvable:$true] %s19
      %s21 = sshll.u32 [#allocation6], 4
      %s22 = int_to_ptr.vmem [resolvable:$true] %s21
      %27 = dma.hbm_to_vmem [thread:$0]  %s20, 1024, %s22, [#allocation7], 128, 128, 8
    $region5: #{tpu_custom_call.1} parent=1 // pred_fallthru
      _
    // Predicated region
    $region6: #{tpu_custom_call.1} parent=1 // pred_check
      _
    $region7: #{tpu_custom_call.1} parent=1 // pred_check_branch
      %29 = sbr.rel (0) target = $region9
    $region8: #{tpu_custom_call.1} parent=1 // pred_region
      %31 = vsyncadd [#allocation9], 0
      %s33 = sshll.u32 %s1, 4
      %s34 = int_to_ptr.hbm [resolvable:$true] %s33
      %s35 = sshll.u32 [#allocation8], 4
      %s36 = int_to_ptr.vmem [resolvable:$true] %s35
      %38 = dma.hbm_to_vmem [thread:$0]  %s34, 128, %s36, [#allocation9]
    $region9: #{tpu_custom_call.1} parent=1 // pred_fallthru
      _
    // Predicated region
    $region10: #{tpu_custom_call.1} parent=1 // pred_check
      _
    $region11: #{tpu_custom_call.1} parent=1 // pred_check_branch
      %40 = sbr.rel (0) target = $region13
    $region12: #{tpu_custom_call.1} parent=1 // pred_region
      _
    $region13: #{tpu_custom_call.1} parent=1 // pred_fallthru
      _
    // Predicated region
    $region14: #{tpu_custom_call.1} parent=1 // pred_check
      _
    $region15: #{tpu_custom_call.1} parent=1 // pred_check_branch
      %42 = sbr.rel (0) target = $region17
    $region16: #{tpu_custom_call.1} parent=1 // pred_region
      _
    $region17: #{tpu_custom_call.1} parent=1 // pred_fallthru
      _
    // Predicated region
    $region18: #{tpu_custom_call.1} parent=1 // pred_check
      _
    $region19: #{tpu_custom_call.1} parent=1 // pred_check_branch
      %44 = sbr.rel (0) target = $region21
    $region20: #{tpu_custom_call.1} parent=1 // pred_region
      _
    $region21: #{tpu_custom_call.1} parent=1 // pred_fallthru
      _
    // Predicated region
    $region22: #{tpu_custom_call.1} parent=1 // pred_check
      _
    $region23: #{tpu_custom_call.1} parent=1 // pred_check_branch
      %46 = sbr.rel (0) target = $region25
    $region24: #{tpu_custom_call.1} parent=1 // pred_region
      _
    $region25: #{tpu_custom_call.1} parent=1 // pred_fallthru
      _
    // Predicated region
    $region26: #{tpu_custom_call.1} parent=1 // pred_check
      _
    $region27: #{tpu_custom_call.1} parent=1 // pred_check_branch
      %48 = sbr.rel (0) target = $region29
    $region28: #{tpu_custom_call.1} parent=1 // pred_region
      %50 = dma.done [#allocation7], 1024
    $region29: #{tpu_custom_call.1} parent=1 // pred_fallthru
      _
    // Predicated region
    $region30: #{tpu_custom_call.1} parent=1 // pred_check
      _
    $region31: #{tpu_custom_call.1} parent=1 // pred_check_branch
      %52 = sbr.rel (0) target = $region33
    $region32: #{tpu_custom_call.1} parent=1 // pred_region
      %54 = dma.done [#allocation9], 128
    $region33: #{tpu_custom_call.1} parent=1 // pred_fallthru
      _
    %p55 = scmp.eq.s32.totalorder 0, 0
    // Predicated region
    $region34: #{tpu_custom_call.1} parent=1 // pred_check
      %p56 = pneg %p55
    $region35: #{tpu_custom_call.1} parent=1 // pred_check_branch
      %58 = sbr.rel (%p56) target = $region37
    $region36: #{tpu_custom_call.1} parent=1 // pred_region
      %vm59 = vcmask 261120
      %60 = vst.msk [vmem:[#allocation3] sm:$0xff] %vm59, 0.0
      %61 = vst.msk [vmem:[#allocation4] sm:$0xff] %vm59, 0.0
    $region37: #{tpu_custom_call.1} parent=1 // pred_fallthru
      _
    %v62 = vld [vmem:[#allocation6] sm:$0xff]
    %v63 = vld [vmem:[#allocation6 + $0x8] sm:$0xff]
    %v64 = vld [vmem:[#allocation6 + $0x10] sm:$0xff]
    %v65 = vld [vmem:[#allocation6 + $0x18] sm:$0xff]
    %v66 = vld [vmem:[#allocation6 + $0x20] sm:$0xff]
    %v67 = vld [vmem:[#allocation6 + $0x28] sm:$0xff]
    %v68 = vld [vmem:[#allocation6 + $0x30] sm:$0xff]
    %v69 = vld [vmem:[#allocation6 + $0x38] sm:$0xff]
    %v70 = vld [vmem:[#allocation8] sm:$0xff]
    %v71 = vld [vmem:[%s3] sm:$0x1]
    %v73 = vperm.slane %v71, 0
    %vm75 = vcmask 64512
    %v77 = vsel %vm75, %v62, 0
    %v80 = vsel %vm75, %v63, 0
    %v83 = vsel %vm75, %v64, 0
    %v86 = vsel %vm75, %v65, 0
    %v89 = vsel %vm75, %v66, 0
    %v92 = vsel %vm75, %v67, 0
    %v95 = vsel %vm75, %v68, 0
    %v98 = vsel %vm75, %v69, 0
    %100 = vmatpush.msra.mxu0 0.0
    %101 = vmatpush.msra.mxu0 0.0
    %102 = vmatpush.msra.mxu0 0.0
    %103 = vmatpush.msra.mxu0 0.0
    %104 = vmatpush.msra.mxu0 0.0
    %105 = vmatpush.msra.mxu0 0.0
    %106 = vmatpush.msra.mxu0 0.0
    %107 = vmatpush.msra.mxu0 0.0
    %108 = vmatpush.msra.mxu0 0.0
    %109 = vmatpush.msra.mxu0 0.0
    %110 = vmatpush.msra.mxu0 0.0
    %111 = vmatpush.msra.mxu0 0.0
    %112 = vmatpush.msra.mxu0 0.0
    %113 = vmatpush.msra.mxu0 0.0
    %114 = vmatpush.msra.mxu0 0.0
    %115 = vmatpush.msra.mxu0 %v70
    %116 = vmatmul.f32.gmra.mxu0 %v77
    %v117 = vpop.f32.mrf.mxu0
    %v118 = vadd.f32 %v73, %v117
    %119 = vmatmul.f32.gmra.mxu0 %v80
    %v120 = vpop.f32.mrf.mxu0
    %v121 = vadd.f32 %v73, %v120
    %122 = vmatmul.f32.gmra.mxu0 %v83
    %v123 = vpop.f32.mrf.mxu0
    %v124 = vadd.f32 %v73, %v123
    %125 = vmatmul.f32.gmra.mxu0 %v86
    %v126 = vpop.f32.mrf.mxu0
    %v127 = vadd.f32 %v73, %v126
    %128 = vmatmul.f32.gmra.mxu0 %v89
    %v129 = vpop.f32.mrf.mxu0
    %v130 = vadd.f32 %v73, %v129
    %131 = vmatmul.f32.gmra.mxu0 %v92
    %v132 = vpop.f32.mrf.mxu0
    %v133 = vadd.f32 %v73, %v132
    %134 = vmatmul.f32.gmra.mxu0 %v95
    %v135 = vpop.f32.mrf.mxu0
    %v136 = vadd.f32 %v73, %v135
    %137 = vmatmul.f32.gmra.mxu0 %v98
    %v138 = vpop.f32.mrf.mxu0
    %v139 = vadd.f32 %v73, %v138
    %140 = vdwg.mxu0
    %141 = vst [vmem:[#allocation2] sm:$0xff] %v118
    %142 = vst [vmem:[#allocation2 + $0x8] sm:$0xff] %v121
    %143 = vst [vmem:[#allocation2 + $0x10] sm:$0xff] %v124
    %144 = vst [vmem:[#allocation2 + $0x18] sm:$0xff] %v127
    %145 = vst [vmem:[#allocation2 + $0x20] sm:$0xff] %v130
    %146 = vst [vmem:[#allocation2 + $0x28] sm:$0xff] %v133
    %147 = vst [vmem:[#allocation2 + $0x30] sm:$0xff] %v136
    %148 = vst [vmem:[#allocation2 + $0x38] sm:$0xff] %v139
    %v149 = vld [vmem:[%s2] sm:$0xff]
    %v150 = vld [vmem:[%s2 + $0x8] sm:$0xff]
    %v151 = vld [vmem:[%s2 + $0x10] sm:$0xff]
    %v152 = vld [vmem:[%s2 + $0x18] sm:$0xff]
    %v153 = vlaneseq
    %v154 = vand.u32 %v153, 127
    %vm155 = vcmp.ge.s32.totalorder %v154, 64
    %vm156 = vcmp.lt.s32.totalorder %v154, 96
    %vm157 = vmand %vm155, %vm156
    %v158 = vld [vmem:[#allocation3] sm:$0xff]
    %v159 = vld [vmem:[#allocation4] sm:$0xff]
    %v160 = vld [vmem:[#allocation2] sm:$0xff]
    %vm161 = vcmask 261120
    %v163 = vsel %vm161, %v158, 0
    %165 = vmatpush.msra.mxu0 0.0
    %166 = vmatpush.msra.mxu0 0.0
    %167 = vmatpush.msra.mxu0 0.0
    %168 = vmatpush.msra.mxu0 0.0
    %169 = vmatpush.msra.mxu0 0.0
    %170 = vmatpush.msra.mxu0 0.0
    %171 = vmatpush.msra.mxu0 0.0
    %172 = vmatpush.msra.mxu0 0.0
    %173 = vmatpush.msra.mxu0 0.0
    %174 = vmatpush.msra.mxu0 0.0
    %175 = vmatpush.msra.mxu0 0.0
    %176 = vmatpush.msra.mxu0 0.0
    %177 = vmatpush.msra.mxu0 %v152
    %178 = vmatpush.msra.mxu0 %v151
    %179 = vmatpush.msra.mxu0 %v150
    %180 = vmatpush.msra.mxu0 %v149
    %181 = vmatmul.f32.gmra.mxu0 %v163
    %v182 = vpop.f32.mrf.mxu0
    %v183 = vadd.f32 0.0, %v182
    %184 = vdwg.mxu0
    %v185 = vadd.f32 %v160, %v183
    %v186 = vadd.f32 %v185, %v185
    %v187 = vsel %vm157, %v186, %v185
    %v188 = vxor.u32 %v187, 2147483648
    %v189 = vmul.f32 %v188, 1.442695
    %v190 = vpow.pop %v189
    %v191 = vadd.f32 %v190, 1.0
    %v192 = vrcp.pop %v191
    %v193 = vmul.f32 %v191, %v192
    %v194 = vsub.f32 1.0, %v193
    %v195 = vmul.f32 %v192, %v194
    %v196 = vadd.f32 %v192, %v195
    %vm197 = vweird.f32 %v191
    %vm198 = vweird.f32 %v192
    %vm199 = vmor %vm197, %vm198
    %v200 = vsel %vm199, %v192, %v196
    %v201 = vand.u32 2147483647, %v191
    %vm202 = vcmp.eq.f32.partialorder %v201, 8.507059e+37
    %v203 = vand.u32 %v191, 2147483648
    %v204 = vor.u32 1.1754944e-38, %v203
    %v205 = vsel %vm202, %v204, %v200
    %v206 = vmul.f32 1.0, %v205
    %v207 = vadd.f32 %v206, %v206
    %v208 = vsub.f32 %v207, 1.0
    %v209 = vsel %vm157, %v208, %v206
    %211 = vrot.lane.b32.xlu0 %v159, 32
    %v212 = vpop.permute.xlu0 %211
    %v214 = vmul.f32 %v209, %v212
    %216 = vrot.lane.b32.xlu0 %v209, 64
    %v217 = vpop.permute.xlu0 %216
    %v219 = vmul.f32 %v209, %v217
    %221 = vrot.lane.b32.xlu0 %v219, 32
    %v222 = vpop.permute.xlu0 %221
    %v224 = vadd.f32 %v214, %v222
    %v225 = vadd.f32 %v224, %v224
    %v226 = vxor.u32 %v225, 2147483648
    %v227 = vmul.f32 %v226, 1.442695
    %v228 = vpow.pop %v227
    %v229 = vadd.f32 %v228, 1.0
    %v230 = vrcp.pop %v229
    %v231 = vmul.f32 %v229, %v230
    %v232 = vsub.f32 1.0, %v231
    %v233 = vmul.f32 %v230, %v232
    %v234 = vadd.f32 %v230, %v233
    %vm235 = vweird.f32 %v229
    %vm236 = vweird.f32 %v230
    %vm237 = vmor %vm235, %vm236
    %v238 = vsel %vm237, %v230, %v234
    %v239 = vand.u32 2147483647, %v229
    %vm240 = vcmp.eq.f32.partialorder %v239, 8.507059e+37
    %v241 = vand.u32 %v229, 2147483648
    %v242 = vor.u32 1.1754944e-38, %v241
    %v243 = vsel %vm240, %v242, %v238
    %v244 = vmul.f32 1.0, %v243
    %v245 = vmul.f32 %v244, 2.0
    %v246 = vsub.f32 %v245, 1.0
    %248 = vrot.lane.b32.xlu0 %v246, 64
    %v249 = vpop.permute.xlu0 %248
    %v251 = vmul.f32 %v209, %v249
    %s252 = scalar_lea.vmem [#allocation2], 8
    %v253 = vld [vmem:[%s252] sm:$0xff]
    %255 = vrot.lane.b32.xlu0 %v251, 32
    %v256 = vpop.permute.xlu0 %255
    %v257 = vsel %vm161, %v256, 0
    %259 = vmatpush.msra.mxu0 0.0
    %260 = vmatpush.msra.mxu0 0.0
    %261 = vmatpush.msra.mxu0 0.0
    %262 = vmatpush.msra.mxu0 0.0
    %263 = vmatpush.msra.mxu0 0.0
    %264 = vmatpush.msra.mxu0 0.0
    %265 = vmatpush.msra.mxu0 0.0
    %266 = vmatpush.msra.mxu0 0.0
    %267 = vmatpush.msra.mxu0 0.0
    %268 = vmatpush.msra.mxu0 0.0
    %269 = vmatpush.msra.mxu0 0.0
    %270 = vmatpush.msra.mxu0 0.0
    %271 = vmatpush.msra.mxu0 %v152
    %272 = vmatpush.msra.mxu0 %v151
    %273 = vmatpush.msra.mxu0 %v150
    %274 = vmatpush.msra.mxu0 %v149
    %275 = vmatmul.f32.gmra.mxu0 %v257
    %v276 = vpop.f32.mrf.mxu0
    %v277 = vadd.f32 0.0, %v276
    %278 = vdwg.mxu0
    %v279 = vadd.f32 %v253, %v277
    %v280 = vadd.f32 %v279, %v279
    %v281 = vsel %vm157, %v280, %v279
    %v282 = vxor.u32 %v281, 2147483648
    %v283 = vmul.f32 %v282, 1.442695
    %v284 = vpow.pop %v283
    %v285 = vadd.f32 %v284, 1.0
    %v286 = vrcp.pop %v285
    %v287 = vmul.f32 %v285, %v286
    %v288 = vsub.f32 1.0, %v287
    %v289 = vmul.f32 %v286, %v288
    %v290 = vadd.f32 %v286, %v289
    %vm291 = vweird.f32 %v285
    %vm292 = vweird.f32 %v286
    %vm293 = vmor %vm291, %vm292
    %v294 = vsel %vm293, %v286, %v290
    %v295 = vand.u32 2147483647, %v285
    %vm296 = vcmp.eq.f32.partialorder %v295, 8.507059e+37
    %v297 = vand.u32 %v285, 2147483648
    %v298 = vor.u32 1.1754944e-38, %v297
    %v299 = vsel %vm296, %v298, %v294
    %v300 = vmul.f32 1.0, %v299
    %v301 = vadd.f32 %v300, %v300
    %v302 = vsub.f32 %v301, 1.0
    %v303 = vsel %vm157, %v302, %v300
    %v304 = vmul.f32 %v303, %v224
    %306 = vrot.lane.b32.xlu0 %v303, 64
    %v307 = vpop.permute.xlu0 %306
    %v309 = vmul.f32 %v303, %v307
    %311 = vrot.lane.b32.xlu0 %v309, 32
    %v312 = vpop.permute.xlu0 %311
    %v314 = vadd.f32 %v304, %v312
    %v315 = vadd.f32 %v314, %v314
    %v316 = vxor.u32 %v315, 2147483648
    %v317 = vmul.f32 %v316, 1.442695
    %v318 = vpow.pop %v317
    %v319 = vadd.f32 %v318, 1.0
    %v320 = vrcp.pop %v319
    %v321 = vmul.f32 %v319, %v320
    %v322 = vsub.f32 1.0, %v321
    %v323 = vmul.f32 %v320, %v322
    %v324 = vadd.f32 %v320, %v323
    %vm325 = vweird.f32 %v319
    %vm326 = vweird.f32 %v320
    %vm327 = vmor %vm325, %vm326
    %v328 = vsel %vm327, %v320, %v324
    %v329 = vand.u32 2147483647, %v319
    %vm330 = vcmp.eq.f32.partialorder %v329, 8.507059e+37
    %v331 = vand.u32 %v319, 2147483648
    %v332 = vor.u32 1.1754944e-38, %v331
    %v333 = vsel %vm330, %v332, %v328
    %v334 = vmul.f32 1.0, %v333
    %v335 = vmul.f32 %v334, 2.0
    %v336 = vsub.f32 %v335, 1.0
    %338 = vrot.lane.b32.xlu0 %v336, 64
    %v339 = vpop.permute.xlu0 %338
    %v341 = vmul.f32 %v303, %v339
    %s342 = scalar_lea.vmem [#allocation2], 16
    %v343 = vld [vmem:[%s342] sm:$0xff]
    %345 = vrot.lane.b32.xlu0 %v341, 32
    %v346 = vpop.permute.xlu0 %345
    %v347 = vsel %vm161, %v346, 0
    %349 = vmatpush.msra.mxu0 0.0
    %350 = vmatpush.msra.mxu0 0.0
    %351 = vmatpush.msra.mxu0 0.0
    %352 = vmatpush.msra.mxu0 0.0
    %353 = vmatpush.msra.mxu0 0.0
    %354 = vmatpush.msra.mxu0 0.0
    %355 = vmatpush.msra.mxu0 0.0
    %356 = vmatpush.msra.mxu0 0.0
    %357 = vmatpush.msra.mxu0 0.0
    %358 = vmatpush.msra.mxu0 0.0
    %359 = vmatpush.msra.mxu0 0.0
    %360 = vmatpush.msra.mxu0 0.0
    %361 = vmatpush.msra.mxu0 %v152
    %362 = vmatpush.msra.mxu0 %v151
    %363 = vmatpush.msra.mxu0 %v150
    %364 = vmatpush.msra.mxu0 %v149
    %365 = vmatmul.f32.gmra.mxu0 %v347
    %v366 = vpop.f32.mrf.mxu0
    %v367 = vadd.f32 0.0, %v366
    %368 = vdwg.mxu0
    %v369 = vadd.f32 %v343, %v367
    %v370 = vadd.f32 %v369, %v369
    %v371 = vsel %vm157, %v370, %v369
    %v372 = vxor.u32 %v371, 2147483648
    %v373 = vmul.f32 %v372, 1.442695
    %v374 = vpow.pop %v373
    %v375 = vadd.f32 %v374, 1.0
    %v376 = vrcp.pop %v375
    %v377 = vmul.f32 %v375, %v376
    %v378 = vsub.f32 1.0, %v377
    %v379 = vmul.f32 %v376, %v378
    %v380 = vadd.f32 %v376, %v379
    %vm381 = vweird.f32 %v375
    %vm382 = vweird.f32 %v376
    %vm383 = vmor %vm381, %vm382
    %v384 = vsel %vm383, %v376, %v380
    %v385 = vand.u32 2147483647, %v375
    %vm386 = vcmp.eq.f32.partialorder %v385, 8.507059e+37
    %v387 = vand.u32 %v375, 2147483648
    %v388 = vor.u32 1.1754944e-38, %v387
    %v389 = vsel %vm386, %v388, %v384
    %v390 = vmul.f32 1.0, %v389
    %v391 = vadd.f32 %v390, %v390
    %v392 = vsub.f32 %v391, 1.0
    %v393 = vsel %vm157, %v392, %v390
    %v394 = vmul.f32 %v393, %v314
    %396 = vrot.lane.b32.xlu0 %v393, 64
    %v397 = vpop.permute.xlu0 %396
    %v399 = vmul.f32 %v393, %v397
    %401 = vrot.lane.b32.xlu0 %v399, 32
    %v402 = vpop.permute.xlu0 %401
    %v404 = vadd.f32 %v394, %v402
    %v405 = vadd.f32 %v404, %v404
    %v406 = vxor.u32 %v405, 2147483648
    %v407 = vmul.f32 %v406, 1.442695
    %v408 = vpow.pop %v407
    %v409 = vadd.f32 %v408, 1.0
    %v410 = vrcp.pop %v409
    %v411 = vmul.f32 %v409, %v410
    %v412 = vsub.f32 1.0, %v411
    %v413 = vmul.f32 %v410, %v412
    %v414 = vadd.f32 %v410, %v413
    %vm415 = vweird.f32 %v409
    %vm416 = vweird.f32 %v410
    %vm417 = vmor %vm415, %vm416
    %v418 = vsel %vm417, %v410, %v414
    %v419 = vand.u32 2147483647, %v409
    %vm420 = vcmp.eq.f32.partialorder %v419, 8.507059e+37
    %v421 = vand.u32 %v409, 2147483648
    %v422 = vor.u32 1.1754944e-38, %v421
    %v423 = vsel %vm420, %v422, %v418
    %v424 = vmul.f32 1.0, %v423
    %v425 = vmul.f32 %v424, 2.0
    %v426 = vsub.f32 %v425, 1.0
    %428 = vrot.lane.b32.xlu0 %v426, 64
    %v429 = vpop.permute.xlu0 %428
    %v431 = vmul.f32 %v393, %v429
    %s432 = scalar_lea.vmem [#allocation2], 24
    %v433 = vld [vmem:[%s432] sm:$0xff]
    %435 = vrot.lane.b32.xlu0 %v431, 32
    %v436 = vpop.permute.xlu0 %435
    %v437 = vsel %vm161, %v436, 0
    %439 = vmatpush.msra.mxu0 0.0
    %440 = vmatpush.msra.mxu0 0.0
    %441 = vmatpush.msra.mxu0 0.0
    %442 = vmatpush.msra.mxu0 0.0
    %443 = vmatpush.msra.mxu0 0.0
    %444 = vmatpush.msra.mxu0 0.0
    %445 = vmatpush.msra.mxu0 0.0
    %446 = vmatpush.msra.mxu0 0.0
    %447 = vmatpush.msra.mxu0 0.0
    %448 = vmatpush.msra.mxu0 0.0
    %449 = vmatpush.msra.mxu0 0.0
    %450 = vmatpush.msra.mxu0 0.0
    %451 = vmatpush.msra.mxu0 %v152
    %452 = vmatpush.msra.mxu0 %v151
    %453 = vmatpush.msra.mxu0 %v150
    %454 = vmatpush.msra.mxu0 %v149
    %455 = vmatmul.f32.gmra.mxu0 %v437
    %v456 = vpop.f32.mrf.mxu0
    %v457 = vadd.f32 0.0, %v456
    %458 = vdwg.mxu0
    %v459 = vadd.f32 %v433, %v457
    %v460 = vadd.f32 %v459, %v459
    %v461 = vsel %vm157, %v460, %v459
    %v462 = vxor.u32 %v461, 2147483648
    %v463 = vmul.f32 %v462, 1.442695
    %v464 = vpow.pop %v463
    %v465 = vadd.f32 %v464, 1.0
    %v466 = vrcp.pop %v465
    %v467 = vmul.f32 %v465, %v466
    %v468 = vsub.f32 1.0, %v467
    %v469 = vmul.f32 %v466, %v468
    %v470 = vadd.f32 %v466, %v469
    %vm471 = vweird.f32 %v465
    %vm472 = vweird.f32 %v466
    %vm473 = vmor %vm471, %vm472
    %v474 = vsel %vm473, %v466, %v470
    %v475 = vand.u32 2147483647, %v465
    %vm476 = vcmp.eq.f32.partialorder %v475, 8.507059e+37
    %v477 = vand.u32 %v465, 2147483648
    %v478 = vor.u32 1.1754944e-38, %v477
    %v479 = vsel %vm476, %v478, %v474
    %v480 = vmul.f32 1.0, %v479
    %v481 = vadd.f32 %v480, %v480
    %v482 = vsub.f32 %v481, 1.0
    %v483 = vsel %vm157, %v482, %v480
    %v484 = vmul.f32 %v483, %v404
    %486 = vrot.lane.b32.xlu0 %v483, 64
    %v487 = vpop.permute.xlu0 %486
    %v489 = vmul.f32 %v483, %v487
    %491 = vrot.lane.b32.xlu0 %v489, 32
    %v492 = vpop.permute.xlu0 %491
    %v494 = vadd.f32 %v484, %v492
    %v495 = vadd.f32 %v494, %v494
    %v496 = vxor.u32 %v495, 2147483648
    %v497 = vmul.f32 %v496, 1.442695
    %v498 = vpow.pop %v497
    %v499 = vadd.f32 %v498, 1.0
    %v500 = vrcp.pop %v499
    %v501 = vmul.f32 %v499, %v500
    %v502 = vsub.f32 1.0, %v501
    %v503 = vmul.f32 %v500, %v502
    %v504 = vadd.f32 %v500, %v503
    %vm505 = vweird.f32 %v499
    %vm506 = vweird.f32 %v500
    %vm507 = vmor %vm505, %vm506
    %v508 = vsel %vm507, %v500, %v504
    %v509 = vand.u32 2147483647, %v499
    %vm510 = vcmp.eq.f32.partialorder %v509, 8.507059e+37
    %v511 = vand.u32 %v499, 2147483648
    %v512 = vor.u32 1.1754944e-38, %v511
    %v513 = vsel %vm510, %v512, %v508
    %v514 = vmul.f32 1.0, %v513
    %v515 = vmul.f32 %v514, 2.0
    %v516 = vsub.f32 %v515, 1.0
    %518 = vrot.lane.b32.xlu0 %v516, 64
    %v519 = vpop.permute.xlu0 %518
    %v521 = vmul.f32 %v483, %v519
    %s522 = scalar_lea.vmem [#allocation2], 32
    %v523 = vld [vmem:[%s522] sm:$0xff]
    %525 = vrot.lane.b32.xlu0 %v521, 32
    %v526 = vpop.permute.xlu0 %525
    %v527 = vsel %vm161, %v526, 0
    %529 = vmatpush.msra.mxu0 0.0
    %530 = vmatpush.msra.mxu0 0.0
    %531 = vmatpush.msra.mxu0 0.0
    %532 = vmatpush.msra.mxu0 0.0
    %533 = vmatpush.msra.mxu0 0.0
    %534 = vmatpush.msra.mxu0 0.0
    %535 = vmatpush.msra.mxu0 0.0
    %536 = vmatpush.msra.mxu0 0.0
    %537 = vmatpush.msra.mxu0 0.0
    %538 = vmatpush.msra.mxu0 0.0
    %539 = vmatpush.msra.mxu0 0.0
    %540 = vmatpush.msra.mxu0 0.0
    %541 = vmatpush.msra.mxu0 %v152
    %542 = vmatpush.msra.mxu0 %v151
    %543 = vmatpush.msra.mxu0 %v150
    %544 = vmatpush.msra.mxu0 %v149
    %545 = vmatmul.f32.gmra.mxu0 %v527
    %v546 = vpop.f32.mrf.mxu0
    %v547 = vadd.f32 0.0, %v546
    %548 = vdwg.mxu0
    %v549 = vadd.f32 %v523, %v547
    %v550 = vadd.f32 %v549, %v549
    %v551 = vsel %vm157, %v550, %v549
    %v552 = vxor.u32 %v551, 2147483648
    %v553 = vmul.f32 %v552, 1.442695
    %v554 = vpow.pop %v553
    %v555 = vadd.f32 %v554, 1.0
    %v556 = vrcp.pop %v555
    %v557 = vmul.f32 %v555, %v556
    %v558 = vsub.f32 1.0, %v557
    %v559 = vmul.f32 %v556, %v558
    %v560 = vadd.f32 %v556, %v559
    %vm561 = vweird.f32 %v555
    %vm562 = vweird.f32 %v556
    %vm563 = vmor %vm561, %vm562
    %v564 = vsel %vm563, %v556, %v560
    %v565 = vand.u32 2147483647, %v555
    %vm566 = vcmp.eq.f32.partialorder %v565, 8.507059e+37
    %v567 = vand.u32 %v555, 2147483648
    %v568 = vor.u32 1.1754944e-38, %v567
    %v569 = vsel %vm566, %v568, %v564
    %v570 = vmul.f32 1.0, %v569
    %v571 = vadd.f32 %v570, %v570
    %v572 = vsub.f32 %v571, 1.0
    %v573 = vsel %vm157, %v572, %v570
    %v574 = vmul.f32 %v573, %v494
    %576 = vrot.lane.b32.xlu0 %v573, 64
    %v577 = vpop.permute.xlu0 %576
    %v579 = vmul.f32 %v573, %v577
    %581 = vrot.lane.b32.xlu0 %v579, 32
    %v582 = vpop.permute.xlu0 %581
    %v584 = vadd.f32 %v574, %v582
    %v585 = vadd.f32 %v584, %v584
    %v586 = vxor.u32 %v585, 2147483648
    %v587 = vmul.f32 %v586, 1.442695
    %v588 = vpow.pop %v587
    %v589 = vadd.f32 %v588, 1.0
    %v590 = vrcp.pop %v589
    %v591 = vmul.f32 %v589, %v590
    %v592 = vsub.f32 1.0, %v591
    %v593 = vmul.f32 %v590, %v592
    %v594 = vadd.f32 %v590, %v593
    %vm595 = vweird.f32 %v589
    %vm596 = vweird.f32 %v590
    %vm597 = vmor %vm595, %vm596
    %v598 = vsel %vm597, %v590, %v594
    %v599 = vand.u32 2147483647, %v589
    %vm600 = vcmp.eq.f32.partialorder %v599, 8.507059e+37
    %v601 = vand.u32 %v589, 2147483648
    %v602 = vor.u32 1.1754944e-38, %v601
    %v603 = vsel %vm600, %v602, %v598
    %v604 = vmul.f32 1.0, %v603
    %v605 = vmul.f32 %v604, 2.0
    %v606 = vsub.f32 %v605, 1.0
    %608 = vrot.lane.b32.xlu0 %v606, 64
    %v609 = vpop.permute.xlu0 %608
    %v611 = vmul.f32 %v573, %v609
    %s612 = scalar_lea.vmem [#allocation2], 40
    %v613 = vld [vmem:[%s612] sm:$0xff]
    %615 = vrot.lane.b32.xlu0 %v611, 32
    %v616 = vpop.permute.xlu0 %615
    %v617 = vsel %vm161, %v616, 0
    %619 = vmatpush.msra.mxu0 0.0
    %620 = vmatpush.msra.mxu0 0.0
    %621 = vmatpush.msra.mxu0 0.0
    %622 = vmatpush.msra.mxu0 0.0
    %623 = vmatpush.msra.mxu0 0.0
    %624 = vmatpush.msra.mxu0 0.0
    %625 = vmatpush.msra.mxu0 0.0
    %626 = vmatpush.msra.mxu0 0.0
    %627 = vmatpush.msra.mxu0 0.0
    %628 = vmatpush.msra.mxu0 0.0
    %629 = vmatpush.msra.mxu0 0.0
    %630 = vmatpush.msra.mxu0 0.0
    %631 = vmatpush.msra.mxu0 %v152
    %632 = vmatpush.msra.mxu0 %v151
    %633 = vmatpush.msra.mxu0 %v150
    %634 = vmatpush.msra.mxu0 %v149
    %635 = vmatmul.f32.gmra.mxu0 %v617
    %v636 = vpop.f32.mrf.mxu0
    %v637 = vadd.f32 0.0, %v636
    %638 = vdwg.mxu0
    %v639 = vadd.f32 %v613, %v637
    %v640 = vadd.f32 %v639, %v639
    %v641 = vsel %vm157, %v640, %v639
    %v642 = vxor.u32 %v641, 2147483648
    %v643 = vmul.f32 %v642, 1.442695
    %v644 = vpow.pop %v643
    %v645 = vadd.f32 %v644, 1.0
    %v646 = vrcp.pop %v645
    %v647 = vmul.f32 %v645, %v646
    %v648 = vsub.f32 1.0, %v647
    %v649 = vmul.f32 %v646, %v648
    %v650 = vadd.f32 %v646, %v649
    %vm651 = vweird.f32 %v645
    %vm652 = vweird.f32 %v646
    %vm653 = vmor %vm651, %vm652
    %v654 = vsel %vm653, %v646, %v650
    %v655 = vand.u32 2147483647, %v645
    %vm656 = vcmp.eq.f32.partialorder %v655, 8.507059e+37
    %v657 = vand.u32 %v645, 2147483648
    %v658 = vor.u32 1.1754944e-38, %v657
    %v659 = vsel %vm656, %v658, %v654
    %v660 = vmul.f32 1.0, %v659
    %v661 = vadd.f32 %v660, %v660
    %v662 = vsub.f32 %v661, 1.0
    %v663 = vsel %vm157, %v662, %v660
    %v664 = vmul.f32 %v663, %v584
    %666 = vrot.lane.b32.xlu0 %v663, 64
    %v667 = vpop.permute.xlu0 %666
    %v669 = vmul.f32 %v663, %v667
    %671 = vrot.lane.b32.xlu0 %v669, 32
    %v672 = vpop.permute.xlu0 %671
    %v674 = vadd.f32 %v664, %v672
    %v675 = vadd.f32 %v674, %v674
    %v676 = vxor.u32 %v675, 2147483648
    %v677 = vmul.f32 %v676, 1.442695
    %v678 = vpow.pop %v677
    %v679 = vadd.f32 %v678, 1.0
    %v680 = vrcp.pop %v679
    %v681 = vmul.f32 %v679, %v680
    %v682 = vsub.f32 1.0, %v681
    %v683 = vmul.f32 %v680, %v682
    %v684 = vadd.f32 %v680, %v683
    %vm685 = vweird.f32 %v679
    %vm686 = vweird.f32 %v680
    %vm687 = vmor %vm685, %vm686
    %v688 = vsel %vm687, %v680, %v684
    %v689 = vand.u32 2147483647, %v679
    %vm690 = vcmp.eq.f32.partialorder %v689, 8.507059e+37
    %v691 = vand.u32 %v679, 2147483648
    %v692 = vor.u32 1.1754944e-38, %v691
    %v693 = vsel %vm690, %v692, %v688
    %v694 = vmul.f32 1.0, %v693
    %v695 = vmul.f32 %v694, 2.0
    %v696 = vsub.f32 %v695, 1.0
    %698 = vrot.lane.b32.xlu0 %v696, 64
    %v699 = vpop.permute.xlu0 %698
    %v701 = vmul.f32 %v663, %v699
    %s702 = scalar_lea.vmem [#allocation2], 48
    %v703 = vld [vmem:[%s702] sm:$0xff]
    %705 = vrot.lane.b32.xlu0 %v701, 32
    %v706 = vpop.permute.xlu0 %705
    %v707 = vsel %vm161, %v706, 0
    %709 = vmatpush.msra.mxu0 0.0
    %710 = vmatpush.msra.mxu0 0.0
    %711 = vmatpush.msra.mxu0 0.0
    %712 = vmatpush.msra.mxu0 0.0
    %713 = vmatpush.msra.mxu0 0.0
    %714 = vmatpush.msra.mxu0 0.0
    %715 = vmatpush.msra.mxu0 0.0
    %716 = vmatpush.msra.mxu0 0.0
    %717 = vmatpush.msra.mxu0 0.0
    %718 = vmatpush.msra.mxu0 0.0
    %719 = vmatpush.msra.mxu0 0.0
    %720 = vmatpush.msra.mxu0 0.0
    %721 = vmatpush.msra.mxu0 %v152
    %722 = vmatpush.msra.mxu0 %v151
    %723 = vmatpush.msra.mxu0 %v150
    %724 = vmatpush.msra.mxu0 %v149
    %725 = vmatmul.f32.gmra.mxu0 %v707
    %v726 = vpop.f32.mrf.mxu0
    %v727 = vadd.f32 0.0, %v726
    %728 = vdwg.mxu0
    %v729 = vadd.f32 %v703, %v727
    %v730 = vadd.f32 %v729, %v729
    %v731 = vsel %vm157, %v730, %v729
    %v732 = vxor.u32 %v731, 2147483648
    %v733 = vmul.f32 %v732, 1.442695
    %v734 = vpow.pop %v733
    %v735 = vadd.f32 %v734, 1.0
    %v736 = vrcp.pop %v735
    %v737 = vmul.f32 %v735, %v736
    %v738 = vsub.f32 1.0, %v737
    %v739 = vmul.f32 %v736, %v738
    %v740 = vadd.f32 %v736, %v739
    %vm741 = vweird.f32 %v735
    %vm742 = vweird.f32 %v736
    %vm743 = vmor %vm741, %vm742
    %v744 = vsel %vm743, %v736, %v740
    %v745 = vand.u32 2147483647, %v735
    %vm746 = vcmp.eq.f32.partialorder %v745, 8.507059e+37
    %v747 = vand.u32 %v735, 2147483648
    %v748 = vor.u32 1.1754944e-38, %v747
    %v749 = vsel %vm746, %v748, %v744
    %v750 = vmul.f32 1.0, %v749
    %v751 = vadd.f32 %v750, %v750
    %v752 = vsub.f32 %v751, 1.0
    %v753 = vsel %vm157, %v752, %v750
    %v754 = vmul.f32 %v753, %v674
    %756 = vrot.lane.b32.xlu0 %v753, 64
    %v757 = vpop.permute.xlu0 %756
    %v759 = vmul.f32 %v753, %v757
    %761 = vrot.lane.b32.xlu0 %v759, 32
    %v762 = vpop.permute.xlu0 %761
    %v764 = vadd.f32 %v754, %v762
    %v765 = vadd.f32 %v764, %v764
    %v766 = vxor.u32 %v765, 2147483648
    %v767 = vmul.f32 %v766, 1.442695
    %v768 = vpow.pop %v767
    %v769 = vadd.f32 %v768, 1.0
    %v770 = vrcp.pop %v769
    %v771 = vmul.f32 %v769, %v770
    %v772 = vsub.f32 1.0, %v771
    %v773 = vmul.f32 %v770, %v772
    %v774 = vadd.f32 %v770, %v773
    %vm775 = vweird.f32 %v769
    %vm776 = vweird.f32 %v770
    %vm777 = vmor %vm775, %vm776
    %v778 = vsel %vm777, %v770, %v774
    %v779 = vand.u32 2147483647, %v769
    %vm780 = vcmp.eq.f32.partialorder %v779, 8.507059e+37
    %v781 = vand.u32 %v769, 2147483648
    %v782 = vor.u32 1.1754944e-38, %v781
    %v783 = vsel %vm780, %v782, %v778
    %v784 = vmul.f32 1.0, %v783
    %v785 = vmul.f32 %v784, 2.0
    %v786 = vsub.f32 %v785, 1.0
    %788 = vrot.lane.b32.xlu0 %v786, 64
    %v789 = vpop.permute.xlu0 %788
    %v791 = vmul.f32 %v753, %v789
    %s792 = scalar_lea.vmem [#allocation2], 56
    %v793 = vld [vmem:[%s792] sm:$0xff]
    %795 = vrot.lane.b32.xlu0 %v791, 32
    %v796 = vpop.permute.xlu0 %795
    %v797 = vsel %vm161, %v796, 0
    %799 = vmatpush.msra.mxu0 0.0
    %800 = vmatpush.msra.mxu0 0.0
    %801 = vmatpush.msra.mxu0 0.0
    %802 = vmatpush.msra.mxu0 0.0
    %803 = vmatpush.msra.mxu0 0.0
    %804 = vmatpush.msra.mxu0 0.0
    %805 = vmatpush.msra.mxu0 0.0
    %806 = vmatpush.msra.mxu0 0.0
    %807 = vmatpush.msra.mxu0 0.0
    %808 = vmatpush.msra.mxu0 0.0
    %809 = vmatpush.msra.mxu0 0.0
    %810 = vmatpush.msra.mxu0 0.0
    %811 = vmatpush.msra.mxu0 %v152
    %812 = vmatpush.msra.mxu0 %v151
    %813 = vmatpush.msra.mxu0 %v150
    %814 = vmatpush.msra.mxu0 %v149
    %815 = vmatmul.f32.gmra.mxu0 %v797
    %v816 = vpop.f32.mrf.mxu0
    %v817 = vadd.f32 0.0, %v816
    %818 = vdwg.mxu0
    %v819 = vadd.f32 %v793, %v817
    %v820 = vadd.f32 %v819, %v819
    %v821 = vsel %vm157, %v820, %v819
    %v822 = vxor.u32 %v821, 2147483648
    %v823 = vmul.f32 %v822, 1.442695
    %v824 = vpow.pop %v823
    %v825 = vadd.f32 %v824, 1.0
    %v826 = vrcp.pop %v825
    %v827 = vmul.f32 %v825, %v826
    %v828 = vsub.f32 1.0, %v827
    %v829 = vmul.f32 %v826, %v828
    %v830 = vadd.f32 %v826, %v829
    %vm831 = vweird.f32 %v825
    %vm832 = vweird.f32 %v826
    %vm833 = vmor %vm831, %vm832
    %v834 = vsel %vm833, %v826, %v830
    %v835 = vand.u32 2147483647, %v825
    %vm836 = vcmp.eq.f32.partialorder %v835, 8.507059e+37
    %v837 = vand.u32 %v825, 2147483648
    %v838 = vor.u32 1.1754944e-38, %v837
    %v839 = vsel %vm836, %v838, %v834
    %v840 = vmul.f32 1.0, %v839
    %v841 = vadd.f32 %v840, %v840
    %v842 = vsub.f32 %v841, 1.0
    %v843 = vsel %vm157, %v842, %v840
    %v844 = vmul.f32 %v843, %v764
    %846 = vrot.lane.b32.xlu0 %v843, 64
    %v847 = vpop.permute.xlu0 %846
    %v849 = vmul.f32 %v843, %v847
    %851 = vrot.lane.b32.xlu0 %v849, 32
    %v852 = vpop.permute.xlu0 %851
    %v854 = vadd.f32 %v844, %v852
    %v855 = vadd.f32 %v854, %v854
    %v856 = vxor.u32 %v855, 2147483648
    %v857 = vmul.f32 %v856, 1.442695
    %v858 = vpow.pop %v857
    %v859 = vadd.f32 %v858, 1.0
    %v860 = vrcp.pop %v859
    %v861 = vmul.f32 %v859, %v860
    %v862 = vsub.f32 1.0, %v861
    %v863 = vmul.f32 %v860, %v862
    %v864 = vadd.f32 %v860, %v863
    %vm865 = vweird.f32 %v859
    %vm866 = vweird.f32 %v860
    %vm867 = vmor %vm865, %vm866
    %v868 = vsel %vm867, %v860, %v864
    %v869 = vand.u32 2147483647, %v859
    %vm870 = vcmp.eq.f32.partialorder %v869, 8.507059e+37
    %v871 = vand.u32 %v859, 2147483648
    %v872 = vor.u32 1.1754944e-38, %v871
    %v873 = vsel %vm870, %v872, %v868
    %v874 = vmul.f32 1.0, %v873
    %v875 = vmul.f32 %v874, 2.0
    %v876 = vsub.f32 %v875, 1.0
    %878 = vrot.lane.b32.xlu0 %v876, 64
    %v879 = vpop.permute.xlu0 %878
    %v881 = vmul.f32 %v843, %v879
    %883 = vrot.lane.b32.xlu0 %v881, 32
    %v884 = vpop.permute.xlu0 %883
    %886 = vst.msk [vmem:[#allocation3] sm:$0xff] %vm161, %v884
    %888 = vrot.lane.b32.xlu0 %v854, 96
    %v889 = vpop.permute.xlu0 %888
    %891 = vst.msk [vmem:[#allocation4] sm:$0xff] %vm161, %v889
    // Predicated region
    $region38: #{tpu_custom_call.1} parent=1 // pred_check
      %p892 = pneg %p55
    $region39: #{tpu_custom_call.1} parent=1 // pred_check_branch
      %894 = sbr.rel (%p892) target = $region41
    $region40: #{tpu_custom_call.1} parent=1 // pred_region
      %v895 = vld [vmem:[%s4] sm:$0xff]
      %v896 = vld [vmem:[%s4 + $0x8] sm:$0xff]
      %v897 = vld [vmem:[%s4 + $0x10] sm:$0xff]
      %v898 = vld [vmem:[%s4 + $0x18] sm:$0xff]
      %v899 = vld [vmem:[#allocation5] sm:$0x1]
      %v901 = vperm.slane %v899, 0
      %v903 = vsel %vm161, %v884, 0
      %905 = vmatpush.msra.mxu0 0.0
      %906 = vmatpush.msra.mxu0 0.0
      %907 = vmatpush.msra.mxu0 0.0
      %908 = vmatpush.msra.mxu0 0.0
      %909 = vmatpush.msra.mxu0 0.0
      %910 = vmatpush.msra.mxu0 0.0
      %911 = vmatpush.msra.mxu0 0.0
      %912 = vmatpush.msra.mxu0 0.0
      %913 = vmatpush.msra.mxu0 0.0
      %914 = vmatpush.msra.mxu0 0.0
      %915 = vmatpush.msra.mxu0 0.0
      %916 = vmatpush.msra.mxu0 0.0
      %917 = vmatpush.msra.mxu0 %v898
      %918 = vmatpush.msra.mxu0 %v897
      %919 = vmatpush.msra.mxu0 %v896
      %920 = vmatpush.msra.mxu0 %v895
      %921 = vmatmul.f32.gmra.mxu0 %v903
      %v922 = vpop.f32.mrf.mxu0
      %v923 = vadd.f32 %v901, %v922
      %924 = vdwg.mxu0
      %vm925 = vcmask 7168
      %926 = vst.msk [vmem:[%s6] sm:$0xff] %vm925, %v923
    $region41: #{tpu_custom_call.1} parent=1 // pred_fallthru
      _
    // Predicated region
    $region42: #{tpu_custom_call.1} parent=1 // pred_check
      _
    $region43: #{tpu_custom_call.1} parent=1 // pred_check_branch
      %928 = sbr.rel (0) target = $region45
    $region44: #{tpu_custom_call.1} parent=1 // pred_region
      _
    $region45: #{tpu_custom_call.1} parent=1 // pred_fallthru
      _
    // Predicated region
    $region46: #{tpu_custom_call.1} parent=1 // pred_check
      _
    $region47: #{tpu_custom_call.1} parent=1 // pred_check_branch
      %930 = sbr.rel (0) target = $region49
    $region48: #{tpu_custom_call.1} parent=1 // pred_region
      _
    $region49: #{tpu_custom_call.1} parent=1 // pred_fallthru
      _
    %931 = vsyncpa [#allocation7], 1
    %932 = vsyncpa [#allocation9], 1

</llo_original>
